<compile_context>
chip_gen: v7x
topology: tpu7x:2x2x1
jax: 0.10.0
libtpu: 0.0.40
codegen_flags: <defaults>
</compile_context>

<pallas_src>
import numpy as np
import jax
import jax.numpy as jnp
from jax import lax
from jax.experimental import pallas as pl
from jax.experimental.pallas import tpu as pltpu


def _round_up(x, m):
    return (x + m - 1) // m * m


def _weight_spec(block_shape, index_map):
    """Grid-invariant (weight/bias) input: single-buffer it when supported.

    Default pipelining allocates 2 buffers even for blocks whose index never
    changes; for the conv weights that is pure VMEM waste.
    """
    try:
        return pl.BlockSpec(block_shape, index_map, pipeline_mode=pl.Buffered(1))
    except Exception:  # pragma: no cover - older jax without pipeline_mode
        return pl.BlockSpec(block_shape, index_map)


def _vmem_limit(footprint_bytes, budget_bytes):
    return int(max(min(1.3 * footprint_bytes + (4 << 20), budget_bytes),
                   footprint_bytes + (2 << 20),
                   16 << 20))


# ----------------------------------------------------------------------------
# Pass 1: key_proj (Conv1d k=3 -> ReLU -> Conv1d k=1), once per batch.
# ----------------------------------------------------------------------------
def _key_proj_kernel(k_ref, w1k, b1k, w2k, b2k, kenc_ref, kk_ref):
    # k_ref: (T2p + 8, Ct); row 0 is the left conv halo (zeros), rows >= T2 are
    # right-pad / lane alignment (their attention columns are masked later).
    T2p = kenc_ref.shape[0]
    hk = jnp.dot(k_ref[0:T2p, :], w1k[0], preferred_element_type=jnp.float32)
    hk = hk + jnp.dot(k_ref[1:T2p + 1, :], w1k[1],
                      preferred_element_type=jnp.float32)
    hk = hk + jnp.dot(k_ref[2:T2p + 2, :], w1k[2],
                      preferred_element_type=jnp.float32)
    hk = jnp.maximum(hk + b1k[...], 0.0)
    ke = jnp.dot(hk.astype(w2k.dtype), w2k[...],
                 preferred_element_type=jnp.float32) + b2k[...]
    kenc_ref[...] = ke
    # per-key ||k||^2 as a lane-dense (8, T2p) block: tiny ones-matmul instead
    # of a (T2p, 1) column reduction that would need a cross-lane transpose.
    ca = ke.shape[-1]
    kk_ref[...] = lax.dot_general(
        jnp.ones((8, ca), jnp.float32), ke * ke,
        (((1,), (1,)), ((), ())), preferred_element_type=jnp.float32)


# ----------------------------------------------------------------------------
# Pass 2: per-tile query_proj + distance attention (+ prior / mask / softmax).
# ----------------------------------------------------------------------------
def _make_attn_kernel(T2, T2p, tq, has_mask, has_prior):
    pad_cols = T2p > T2

    def kernel(*refs):
        i = 0
        q_ref = refs[i]; i += 1      # (T1p + 8, Cm), row 0 = left halo pad
        kenc_ref = refs[i]; i += 1   # (T2p, Ca) f32
        kk_ref = refs[i]; i += 1     # (8, T2p) f32, row 0 = ||k||^2
        w1q = refs[i]; i += 1        # (3, Cm, 2*Cm)
        b1q = refs[i]; i += 1        # (1, 2*Cm) f32
        w2q = refs[i]; i += 1        # (2*Cm, Cm)
        b2q = refs[i]; i += 1        # (1, Cm) f32
        w3q = refs[i]; i += 1        # (Cm, Ca)
        b3q = refs[i]; i += 1        # (1, Ca) f32
        mask_ref = None
        prior_ref = None
        if has_mask:
            mask_ref = refs[i]; i += 1   # (1, T2p) additive f32 (-1e30 masked)
        if has_prior:
            prior_ref = refs[i]; i += 1  # (tq, T2p) raw prior (log in-kernel)
        attn_ref = refs[i]; i += 1       # (tq, T2p)
        logp_ref = refs[i]; i += 1       # (tq, T2p)

        # ---- query_proj for this tile: Conv1d(3)->ReLU->Conv1d(1)->ReLU->
        #      Conv1d(1).  Per-tile => even pipeline, no per-batch scratch,
        #      and the T1 grid axis stays fully parallel. --------------------
        row0 = pl.multiple_of(pl.program_id(1) * tq, 8)
        qs = q_ref[pl.ds(row0, tq + 8), :]          # aligned slab incl. halo
        hq = jnp.dot(qs[0:tq], w1q[0], preferred_element_type=jnp.float32)
        hq = hq + jnp.dot(qs[1:tq + 1], w1q[1],
                          preferred_element_type=jnp.float32)
        hq = hq + jnp.dot(qs[2:tq + 2], w1q[2],
                          preferred_element_type=jnp.float32)
        # TODO(synk): on v6e/v7x the 3 taps above could be folded into a single
        # im2col matmul (K = 3*Cm) to better fill the 256-deep MXU.
        hq = jnp.maximum(hq + b1q[...], 0.0)
        hq = jnp.maximum(
            jnp.dot(hq.astype(w2q.dtype), w2q[...],
                    preferred_element_type=jnp.float32) + b2q[...], 0.0)
        qt = jnp.dot(hq.astype(w3q.dtype), w3q[...],
                     preferred_element_type=jnp.float32) + b3q[...]  # (tq, Ca)

        # ---- -0.0005 * ||q - k||^2 = -0.0005 * (qq - 2 qk + kk), f32 --------
        ke = kenc_ref[...]
        qk = lax.dot_general(qt, ke, (((1,), (1,)), ((), ())),
                             preferred_element_type=jnp.float32)     # (tq, T2p)
        if has_prior:
            # ||q||^2 is a per-row constant: it cancels in log_softmax and in
            # the final softmax, so skip it (saves a cross-lane reduce + a full
            # (tq, T2p) VPU pass).
            logits = -0.0005 * (kk_ref[0:1, :] - 2.0 * qk)
        else:
            qq = jnp.sum(qt * qt, axis=-1, keepdims=True)
            logits = -0.0005 * (qq - 2.0 * qk + kk_ref[0:1, :])

        if pad_cols:
            col = lax.broadcasted_iota(jnp.int32, (1, T2p), 1)
            logits = logits + jnp.where(col < T2, 0.0, -1e30)

        if has_prior:
            m = jnp.max(logits, axis=-1, keepdims=True)
            lse = jnp.log(jnp.sum(jnp.exp(logits - m), axis=-1,
                                  keepdims=True)) + m
            logits = (logits - lse) + jnp.log(prior_ref[...] + 1e-8)  # EUP log

        logp_ref[...] = logits.astype(logp_ref.dtype)   # attn_logprob (pre-mask)

        if has_mask:
            logits = logits + mask_ref[...]

        m2 = jnp.max(logits, axis=-1, keepdims=True)
        e = jnp.exp(logits - m2)
        denom = jnp.sum(e, axis=-1, keepdims=True)
        attn_ref[...] = (e * (1.0 / denom)).astype(attn_ref.dtype)

    return kernel


# ----------------------------------------------------------------------------
# Wrapper: layout plumbing + the two pallas_calls.
# ----------------------------------------------------------------------------
def conv_attention_forward(queries, keys, params, mask=None, attn_prior=None,
                           tile_t1=512, proj_dtype=jnp.bfloat16,
                           out_dtype=jnp.float32,
                           vmem_budget_bytes=48 * 1024 * 1024,
                           return_padded=False):
    """ConvAttention forward.

    queries: (B, n_mel, T1), keys: (B, n_text, T2)   [PyTorch B x C x T layout]
    mask: (B, T2), nonzero/True = masked text position.
    attn_prior: (B, T1, T2) raw prior.

    Returns (attn, attn_logprob):
      return_padded=False -> (B, 1, T1, T2) each (reference semantics).
      return_padded=True  -> (B, T1p, T2p) each (padded extents).  Pad columns
        of attn are exactly 0; prefer this for perf (skips a full HBM
        re-read/re-write of both dense outputs).
    """
    B, Cm, T1 = queries.shape
    _, Ct, T2 = keys.shape
    Ca = params["w2k"].shape[1]
    f32 = jnp.float32
    bpe = jnp.dtype(proj_dtype).itemsize
    out_bpe = jnp.dtype(out_dtype).itemsize

    has_mask = mask is not None
    has_prior = attn_prior is not None

    T2p = _round_up(T2, 128)                      # lane-dense outputs

    # ---- T1 tile sizing against the VMEM budget --------------------------
    def footprint(tq_):
        t1p = _round_up(T1, tq_)
        fp = (t1p + 8) * Cm * bpe * 2                          # q_in (2 bufs)
        fp += T2p * Ca * 4 * 2 + 8 * T2p * 4 * 2               # kenc, kk
        fp += (3 * Cm * 2 * Cm + 2 * Cm * Cm + Cm * Ca) * bpe  # weights (1 buf)
        fp += (2 * Cm + Cm + Ca) * 4                           # biases (1 buf)
        fp += (T2p * 4 * 2) if has_mask else 0
        fp += (tq_ * T2p * 4 * 2) if has_prior else 0
        fp += 2 * tq_ * T2p * out_bpe * 2                      # two outputs
        fp += tq_ * 2 * Cm * 4 + 3 * tq_ * T2p * 4             # live intermediates
        return fp

    tq = _round_up(min(int(tile_t1), _round_up(T1, 8)), 8)
    while tq > 8 and footprint(tq) > int(0.8 * vmem_budget_bytes):
        tq = max(8, _round_up(tq // 2, 8))
    T1p = _round_up(T1, tq)
    nT1 = T1p // tq

    # ---- layout plumbing: NCT -> NTC, conv halo folded into the alignment
    #      pad, conv operands cast to bf16 (MXU-native) --------------------
    q_in = jnp.pad(jnp.transpose(queries, (0, 2, 1)).astype(proj_dtype),
                   ((0, 0), (1, T1p - T1 + 7), (0, 0)))        # (B, T1p+8, Cm)
    k_in = jnp.pad(jnp.transpose(keys, (0, 2, 1)).astype(proj_dtype),
                   ((0, 0), (1, T2p - T2 + 7), (0, 0)))        # (B, T2p+8, Ct)

    w = {k: params[k].astype(proj_dtype)
         for k in ("w1k", "w2k", "w1q", "w2q", "w3q")}
    b = {k: params[k].astype(f32)
         for k in ("b1k", "b2k", "b1q", "b2q", "b3q")}

    # ---- pass 1: key projection (once per batch) --------------------------
    fp_k = ((T2p + 8) * Ct * bpe * 2
            + (3 * Ct * 2 * Ct + 2 * Ct * Ca) * bpe + (2 * Ct + Ca) * 4
            + (T2p * Ca + 8 * T2p) * 4 * 2
            + T2p * 2 * Ct * 4 * 2)
    kenc, kk = pl.pallas_call(
        _key_proj_kernel,
        out_shape=(jax.ShapeDtypeStruct((B, T2p, Ca), f32),
                   jax.ShapeDtypeStruct((B, 8, T2p), f32)),
        grid_spec=pltpu.PrefetchScalarGridSpec(
            num_scalar_prefetch=0,
            grid=(B,),
            in_specs=[
                pl.BlockSpec((None, T2p + 8, Ct), lambda bb: (bb, 0, 0)),
                _weight_spec((3, Ct, 2 * Ct), lambda bb: (0, 0, 0)),
                _weight_spec((1, 2 * Ct), lambda bb: (0, 0)),
                _weight_spec((2 * Ct, Ca), lambda bb: (0, 0)),
                _weight_spec((1, Ca), lambda bb: (0, 0)),
            ],
            out_specs=(pl.BlockSpec((None, T2p, Ca), lambda bb: (bb, 0, 0)),
                       pl.BlockSpec((None, 8, T2p), lambda bb: (bb, 0, 0)))),
        compiler_params=pltpu.CompilerParams(
            dimension_semantics=("parallel",),
            vmem_limit_bytes=_vmem_limit(fp_k, vmem_budget_bytes)),
    )(k_in, w["w1k"], b["b1k"], w["w2k"], b["b2k"])

    # ---- pass 2: per-tile query projection + attention ---------------------
    inputs = [q_in, kenc, kk,
              w["w1q"], b["b1q"], w["w2q"], b["b2q"], w["w3q"], b["b3q"]]
    in_specs = [
        pl.BlockSpec((None, T1p + 8, Cm), lambda bb, t: (bb, 0, 0)),
        pl.BlockSpec((None, T2p, Ca), lambda bb, t: (bb, 0, 0)),
        pl.BlockSpec((None, 8, T2p), lambda bb, t: (bb, 0, 0)),
        _weight_spec((3, Cm, 2 * Cm), lambda bb, t: (0, 0, 0)),
        _weight_spec((1, 2 * Cm), lambda bb, t: (0, 0)),
        _weight_spec((2 * Cm, Cm), lambda bb, t: (0, 0)),
        _weight_spec((1, Cm), lambda bb, t: (0, 0)),
        _weight_spec((Cm, Ca), lambda bb, t: (0, 0)),
        _weight_spec((1, Ca), lambda bb, t: (0, 0)),
    ]
    if has_mask:
        # additive mask: -1e30 at masked text positions, 0 elsewhere / pad cols
        madd = jnp.where(mask.astype(bool), -1e30, 0.0).astype(f32)
        madd = jnp.pad(madd, ((0, 0), (0, T2p - T2)))[:, None, :]  # (B, 1, T2p)
        inputs.append(madd)
        in_specs.append(pl.BlockSpec((None, 1, T2p), lambda bb, t: (bb, 0, 0)))
    if has_prior:
        # raw prior only gets one cheap alignment pad; log(prior + 1e-8) is
        # taken in-kernel on the otherwise-idle EUP.
        prior_in = jnp.pad(attn_prior.astype(f32),
                           ((0, 0), (0, T1p - T1), (0, T2p - T2)))
        inputs.append(prior_in)
        in_specs.append(pl.BlockSpec((None, tq, T2p), lambda bb, t: (bb, t, 0)))

    attn_pad, logp_pad = pl.pallas_call(
        _make_attn_kernel(T2, T2p, tq, has_mask, has_prior),
        out_shape=(jax.ShapeDtypeStruct((B, T1p, T2p), out_dtype),
                   jax.ShapeDtypeStruct((B, T1p, T2p), out_dtype)),
        grid_spec=pltpu.PrefetchScalarGridSpec(
            num_scalar_prefetch=0,
            grid=(B, nT1),
            in_specs=in_specs,
            out_specs=(pl.BlockSpec((None, tq, T2p), lambda bb, t: (bb, t, 0)),
                       pl.BlockSpec((None, tq, T2p), lambda bb, t: (bb, t, 0)))),
        compiler_params=pltpu.CompilerParams(
            dimension_semantics=("parallel", "parallel"),
            vmem_limit_bytes=_vmem_limit(footprint(tq), vmem_budget_bytes)),
    )(*inputs)

    if return_padded:
        return attn_pad, logp_pad
    return attn_pad[:, None, :T1, :T2], logp_pad[:, None, :T1, :T2]


# ----------------------------------------------------------------------------
# Deterministic parameter init (xavier-uniform, like the PyTorch module)
# ----------------------------------------------------------------------------
def _xavier(key, shape, fan_in, fan_out, gain=1.0):
    a = gain * np.sqrt(6.0 / (fan_in + fan_out))
    return jax.random.uniform(key, shape, jnp.float32, -a, a)


def _bias(key, shape, fan_in):
    a = 1.0 / np.sqrt(fan_in)
    return jax.random.uniform(key, shape, jnp.float32, -a, a)


def init_params(key, n_mel, n_text, n_att):
    ks = jax.random.split(key, 10)
    relu_gain = float(np.sqrt(2.0))
    p = {}
    # key_proj: Conv1d(n_text, 2*n_text, 3) -> ReLU -> Conv1d(2*n_text, n_att, 1)
    p["w1k"] = _xavier(ks[0], (3, n_text, 2 * n_text), n_text * 3, 2 * n_text * 3, relu_gain)
    p["b1k"] = _bias(ks[1], (1, 2 * n_text), n_text * 3)
    p["w2k"] = _xavier(ks[2], (2 * n_text, n_att), 2 * n_text, n_att)
    p["b2k"] = _bias(ks[3], (1, n_att), 2 * n_text)
    # query_proj: Conv1d(n_mel, 2*n_mel, 3) -> ReLU -> Conv1d(2*n_mel, n_mel, 1)
    #             -> ReLU -> Conv1d(n_mel, n_att, 1)
    p["w1q"] = _xavier(ks[4], (3, n_mel, 2 * n_mel), n_mel * 3, 2 * n_mel * 3, relu_gain)
    p["b1q"] = _bias(ks[5], (1, 2 * n_mel), n_mel * 3)
    p["w2q"] = _xavier(ks[6], (2 * n_mel, n_mel), 2 * n_mel, n_mel)
    p["b2q"] = _bias(ks[7], (1, n_mel), 2 * n_mel)
    p["w3q"] = _xavier(ks[8], (n_mel, n_att), n_mel, n_att)
    p["b3q"] = _bias(ks[9], (1, n_att), n_mel)
    # TODO(synk): self.attn_proj (Conv2d) is defined in __init__ but never used
    # in forward(), so it is intentionally omitted here.
    # TODO(synk): use_query_proj=False passthrough branch not implemented
    # (the module default is True).
    return p


# ----------------------------------------------------------------------------
# Pure-JAX reference (mirrors the PyTorch forward semantics)
# ----------------------------------------------------------------------------
def reference_forward(queries, keys, p, mask=None, attn_prior=None):
    q_t = jnp.transpose(queries, (0, 2, 1))
    k_t = jnp.transpose(keys, (0, 2, 1))

    def conv3(x, w, b):
        xp = jnp.pad(x, ((0, 0), (1, 1), (0, 0)))
        T = x.shape[1]
        return sum(jnp.einsum("btc,cd->btd", xp[:, k:k + T], w[k])
                   for k in range(3)) + b

    hk = jax.nn.relu(conv3(k_t, p["w1k"], p["b1k"]))
    keys_enc = jnp.einsum("btc,cd->btd", hk, p["w2k"]) + p["b2k"]

    hq = jax.nn.relu(conv3(q_t, p["w1q"], p["b1q"]))
    hq = jax.nn.relu(jnp.einsum("btc,cd->btd", hq, p["w2q"]) + p["b2q"])
    queries_enc = jnp.einsum("btc,cd->btd", hq, p["w3q"]) + p["b3q"]

    diff = queries_enc[:, :, None, :] - keys_enc[:, None, :, :]
    attn = -0.0005 * jnp.sum(diff * diff, axis=-1)
    if attn_prior is not None:
        attn = jax.nn.log_softmax(attn, axis=-1) + jnp.log(attn_prior + 1e-8)
    logp = attn
    if mask is not None:
        attn = jnp.where(mask[:, None, :] != 0, -jnp.inf, attn)
    attn = jax.nn.softmax(attn, axis=-1)
    return attn[:, None], logp[:, None]


# ----------------------------------------------------------------------------
if __name__ == "__main__":
    B, T1, T2 = 2, 8, 16
    n_mel, n_text, n_att = 16, 32, 16

    root = jax.random.PRNGKey(0)
    kq, kk_, kp, kpar = jax.random.split(root, 4)

    queries = jax.random.normal(kq, (B, n_mel, T1), jnp.float32)   # B x C x T1
    keys = jax.random.normal(kk_, (B, n_text, T2), jnp.float32)    # B x C2 x T2
    attn_prior = jax.random.uniform(kp, (B, T1, T2), jnp.float32, 0.05, 1.0)
    # mask: True marks padded text positions (masked out before the softmax)
    mask = jnp.zeros((B, T2), jnp.bool_).at[1, T2 - 3:].set(True)

    params = init_params(kpar, n_mel, n_text, n_att)

    def check(proj_dtype, use_mask, use_prior, rtol_attn, atol_attn,
              rtol_lp, atol_lp):
        m = mask if use_mask else None
        p = attn_prior if use_prior else None
        attn_pad, logp_pad = conv_attention_forward(
            queries, keys, params, mask=m, attn_prior=p,
            proj_dtype=proj_dtype, return_padded=True)
        jax.block_until_ready((attn_pad, logp_pad))
        # consumer-side crop (kept out of the wrapper so the hot path never
        # re-reads / re-writes the full dense outputs just to drop padding)
        attn = np.asarray(attn_pad)[:, None, :T1, :T2]
        logp = np.asarray(logp_pad)[:, None, :T1, :T2]
        ref_attn, ref_logp = reference_forward(queries, keys, params,
                                               mask=m, attn_prior=p)
        np.testing.assert_allclose(attn, np.asarray(ref_attn),
                                   rtol=rtol_attn, atol=atol_attn)
        np.testing.assert_allclose(logp, np.asarray(ref_logp),
                                   rtol=rtol_lp, atol=atol_lp)

    # exact-precision path (f32 projections): tight tolerances
    check(jnp.float32, True, True, 2e-4, 1e-5, 1e-4, 1e-4)
    check(jnp.float32, False, False, 2e-4, 1e-5, 1e-4, 1e-4)
    # production path (bf16 conv stack on the MXU): deliberately looser
    check(jnp.bfloat16, True, True, 5e-2, 2e-2, 5e-2, 5e-2)

    print("KERNEL_OK")
</pallas_src>

<mosaic_0001>
module attributes {stable_mosaic.version = 11 : i64} {
  func.func @_key_proj_kernel(%arg0: i32, %arg1: memref<1x136x32xf32, #tpu.memory_space<vmem>>, %arg2: memref<3x32x64xf32, #tpu.memory_space<vmem>>, %arg3: memref<1x64xf32, #tpu.memory_space<vmem>>, %arg4: memref<64x16xf32, #tpu.memory_space<vmem>>, %arg5: memref<1x16xf32, #tpu.memory_space<vmem>>, %arg6: memref<1x128x16xf32, #tpu.memory_space<vmem>>, %arg7: memref<1x8x128xf32, #tpu.memory_space<vmem>>) attributes {dimension_semantics = [#tpu.dimension_semantics<parallel>], iteration_bounds = array<i64: 2>, scalar_prefetch = 0 : i64, scratch_operands = 0 : i64, tpu.core_type = #tpu.core_type<tc>, window_params = [{transform_indices = @transform_0, window_bounds = array<i64: 1, 136, 32>}, {pipeline_mode = #tpu.pipeline_mode<synchronous>, transform_indices = @transform_1, window_bounds = array<i64: 3, 32, 64>}, {pipeline_mode = #tpu.pipeline_mode<synchronous>, transform_indices = @transform_2, window_bounds = array<i64: 1, 64>}, {pipeline_mode = #tpu.pipeline_mode<synchronous>, transform_indices = @transform_3, window_bounds = array<i64: 64, 16>}, {pipeline_mode = #tpu.pipeline_mode<synchronous>, transform_indices = @transform_4, window_bounds = array<i64: 1, 16>}, {transform_indices = @transform_5, window_bounds = array<i64: 1, 128, 16>}, {transform_indices = @transform_6, window_bounds = array<i64: 1, 8, 128>}]} {
    %c0 = arith.constant 0 : index
    %c0_0 = arith.constant 0 : index
    %c0_1 = arith.constant 0 : index
    %0 = vector.load %arg1[%c0, %c0_0, %c0_1] : memref<1x136x32xf32, #tpu.memory_space<vmem>>, vector<1x128x32xf32>
    %1 = vector.shape_cast %0 : vector<1x128x32xf32> to vector<128x32xf32>
    %c0_2 = arith.constant 0 : index
    %c0_3 = arith.constant 0 : index
    %c0_4 = arith.constant 0 : index
    %2 = vector.load %arg2[%c0_2, %c0_3, %c0_4] : memref<3x32x64xf32, #tpu.memory_space<vmem>>, vector<1x32x64xf32>
    %3 = vector.shape_cast %2 : vector<1x32x64xf32> to vector<32x64xf32>
    %cst = arith.constant dense<0.000000e+00> : vector<128x64xf32>
    %4 = tpu.matmul %1, %3, %cst {dimension_numbers = #tpu.dot_dimension_numbers<[1], [0], [0], [1], [0, 0, 1, 1], [], []>} : vector<128x32xf32>, vector<32x64xf32>, vector<128x64xf32> -> vector<128x64xf32>
    %c0_5 = arith.constant 0 : index
    %c1 = arith.constant 1 : index
    %c0_6 = arith.constant 0 : index
    %5 = vector.load %arg1[%c0_5, %c1, %c0_6] : memref<1x136x32xf32, #tpu.memory_space<vmem>>, vector<1x128x32xf32>
    %6 = vector.shape_cast %5 : vector<1x128x32xf32> to vector<128x32xf32>
    %c1_7 = arith.constant 1 : index
    %c0_8 = arith.constant 0 : index
    %c0_9 = arith.constant 0 : index
    %7 = vector.load %arg2[%c1_7, %c0_8, %c0_9] : memref<3x32x64xf32, #tpu.memory_space<vmem>>, vector<1x32x64xf32>
    %8 = vector.shape_cast %7 : vector<1x32x64xf32> to vector<32x64xf32>
    %cst_10 = arith.constant dense<0.000000e+00> : vector<128x64xf32>
    %9 = tpu.matmul %6, %8, %cst_10 {dimension_numbers = #tpu.dot_dimension_numbers<[1], [0], [0], [1], [0, 0, 1, 1], [], []>} : vector<128x32xf32>, vector<32x64xf32>, vector<128x64xf32> -> vector<128x64xf32>
    %10 = arith.addf %4, %9 : vector<128x64xf32>
    %c0_11 = arith.constant 0 : index
    %c2 = arith.constant 2 : index
    %c0_12 = arith.constant 0 : index
    %11 = vector.load %arg1[%c0_11, %c2, %c0_12] : memref<1x136x32xf32, #tpu.memory_space<vmem>>, vector<1x128x32xf32>
    %12 = vector.shape_cast %11 : vector<1x128x32xf32> to vector<128x32xf32>
    %c2_13 = arith.constant 2 : index
    %c0_14 = arith.constant 0 : index
    %c0_15 = arith.constant 0 : index
    %13 = vector.load %arg2[%c2_13, %c0_14, %c0_15] : memref<3x32x64xf32, #tpu.memory_space<vmem>>, vector<1x32x64xf32>
    %14 = vector.shape_cast %13 : vector<1x32x64xf32> to vector<32x64xf32>
    %cst_16 = arith.constant dense<0.000000e+00> : vector<128x64xf32>
    %15 = tpu.matmul %12, %14, %cst_16 {dimension_numbers = #tpu.dot_dimension_numbers<[1], [0], [0], [1], [0, 0, 1, 1], [], []>} : vector<128x32xf32>, vector<32x64xf32>, vector<128x64xf32> -> vector<128x64xf32>
    %16 = arith.addf %10, %15 : vector<128x64xf32>
    %c0_17 = arith.constant 0 : index
    %c0_18 = arith.constant 0 : index
    %17 = vector.load %arg3[%c0_17, %c0_18] : memref<1x64xf32, #tpu.memory_space<vmem>>, vector<1x64xf32>
    %18 = vector.broadcast %17 : vector<1x64xf32> to vector<128x64xf32>
    %19 = arith.addf %16, %18 : vector<128x64xf32>
    %cst_19 = arith.constant 0.000000e+00 : f32
    %20 = vector.broadcast %cst_19 : f32 to vector<128x64xf32>
    %21 = arith.maximumf %19, %20 : vector<128x64xf32>
    %c0_20 = arith.constant 0 : index
    %c0_21 = arith.constant 0 : index
    %22 = vector.load %arg4[%c0_20, %c0_21] : memref<64x16xf32, #tpu.memory_space<vmem>>, vector<64x16xf32>
    %cst_22 = arith.constant dense<0.000000e+00> : vector<128x16xf32>
    %23 = tpu.matmul %21, %22, %cst_22 {dimension_numbers = #tpu.dot_dimension_numbers<[1], [0], [0], [1], [0, 0, 1, 1], [], []>} : vector<128x64xf32>, vector<64x16xf32>, vector<128x16xf32> -> vector<128x16xf32>
    %c0_23 = arith.constant 0 : index
    %c0_24 = arith.constant 0 : index
    %24 = vector.load %arg5[%c0_23, %c0_24] : memref<1x16xf32, #tpu.memory_space<vmem>>, vector<1x16xf32>
    %25 = vector.broadcast %24 : vector<1x16xf32> to vector<128x16xf32>
    %26 = arith.addf %23, %25 : vector<128x16xf32>
    %c0_25 = arith.constant 0 : index
    %c0_26 = arith.constant 0 : index
    %c0_27 = arith.constant 0 : index
    %27 = vector.load %arg6[%c0_25, %c0_26, %c0_27] : memref<1x128x16xf32, #tpu.memory_space<vmem>>, vector<1x128x16xf32>
    %28 = vector.shape_cast %27 : vector<1x128x16xf32> to vector<128x16xf32>
    %29 = vector.shape_cast %26 : vector<128x16xf32> to vector<1x128x16xf32>
    tpu.vector_store %arg6[%c0_25, %c0_26, %c0_27], %29 {strides = array<i32>} : memref<1x128x16xf32, #tpu.memory_space<vmem>>, vector<1x128x16xf32>,
    %cst_28 = arith.constant 1.000000e+00 : f32
    %30 = vector.broadcast %cst_28 : f32 to vector<8x16xf32>
    %31 = arith.mulf %26, %26 : vector<128x16xf32>
    %cst_29 = arith.constant dense<0.000000e+00> : vector<8x128xf32>
    %32 = tpu.matmul %30, %31, %cst_29 {dimension_numbers = #tpu.dot_dimension_numbers<[1], [1], [0], [0], [0, 0, 1, 0], [], []>} : vector<8x16xf32>, vector<128x16xf32>, vector<8x128xf32> -> vector<8x128xf32>
    %c0_30 = arith.constant 0 : index
    %c0_31 = arith.constant 0 : index
    %c0_32 = arith.constant 0 : index
    %33 = vector.load %arg7[%c0_30, %c0_31, %c0_32] : memref<1x8x128xf32, #tpu.memory_space<vmem>>, vector<1x8x128xf32>
    %34 = vector.shape_cast %33 : vector<1x8x128xf32> to vector<8x128xf32>
    %35 = vector.shape_cast %32 : vector<8x128xf32> to vector<1x8x128xf32>
    tpu.vector_store %arg7[%c0_30, %c0_31, %c0_32], %35 {strides = array<i32>} : memref<1x8x128xf32, #tpu.memory_space<vmem>>, vector<1x8x128xf32>,
    return
  }
  func.func @transform_0(%arg0: i32) -> (i32, i32, i32) {
    %c0_i32 = arith.constant 0 : i32
    %c0_i32_0 = arith.constant 0 : i32
    %c0_i32_1 = arith.constant 0 : i32
    return %arg0, %c0_i32, %c0_i32_0 : i32, i32, i32
  }
  func.func @transform_1(%arg0: i32) -> (i32, i32, i32) {
    %c0_i32 = arith.constant 0 : i32
    %c0_i32_0 = arith.constant 0 : i32
    %c0_i32_1 = arith.constant 0 : i32
    %c0_i32_2 = arith.constant 0 : i32
    return %c0_i32, %c0_i32_0, %c0_i32_1 : i32, i32, i32
  }
  func.func @transform_2(%arg0: i32) -> (i32, i32) {
    %c0_i32 = arith.constant 0 : i32
    %c0_i32_0 = arith.constant 0 : i32
    %c0_i32_1 = arith.constant 0 : i32
    return %c0_i32, %c0_i32_0 : i32, i32
  }
  func.func @transform_3(%arg0: i32) -> (i32, i32) {
    %c0_i32 = arith.constant 0 : i32
    %c0_i32_0 = arith.constant 0 : i32
    %c0_i32_1 = arith.constant 0 : i32
    return %c0_i32, %c0_i32_0 : i32, i32
  }
  func.func @transform_4(%arg0: i32) -> (i32, i32) {
    %c0_i32 = arith.constant 0 : i32
    %c0_i32_0 = arith.constant 0 : i32
    %c0_i32_1 = arith.constant 0 : i32
    return %c0_i32, %c0_i32_0 : i32, i32
  }
  func.func @transform_5(%arg0: i32) -> (i32, i32, i32) {
    %c0_i32 = arith.constant 0 : i32
    %c0_i32_0 = arith.constant 0 : i32
    %c0_i32_1 = arith.constant 0 : i32
    return %arg0, %c0_i32, %c0_i32_0 : i32, i32, i32
  }
  func.func @transform_6(%arg0: i32) -> (i32, i32, i32) {
    %c0_i32 = arith.constant 0 : i32
    %c0_i32_0 = arith.constant 0 : i32
    %c0_i32_1 = arith.constant 0 : i32
    return %arg0, %c0_i32, %c0_i32_0 : i32, i32, i32
  }
}

</mosaic_0001>

<llo_original>
// kernel: tpu_custom_call.1
$region0: #{tpu_custom_call.1}
  #allocation0 [shape = 'u32[]', space=smem, size = 0x4, offset = 0x4, fixed_abs, tag = 'smem constant byte address 0x4 - core index']
  #allocation1 [shape = 'u32[144,128]{1,0:T(1,128)}', space=vmem, size = 0x12000, scoped, tag = 'internal scratch']
  %s0 = inlined_call_operand.vmem [shape: f32[2,136,32], index: 0, kind: input, shape index: {}]
  %s1 = inlined_call_operand.vmem [shape: f32[3,32,64], index: 1, kind: input, shape index: {}]
  %s2 = inlined_call_operand.vmem [shape: f32[1,64], index: 2, kind: input, shape index: {}]
  %s3 = inlined_call_operand.vmem [shape: f32[64,16], index: 3, kind: input, shape index: {}]
  %s4 = inlined_call_operand.vmem [shape: f32[1,16], index: 4, kind: input, shape index: {}]
  %s5 = inlined_call_operand.vmem [shape: f32[2,128,16], index: 5, kind: output, shape index: {0}]
  %s6 = inlined_call_operand.hbm [shape: f32[2,8,128], index: 6, kind: output, shape index: {1}]
  %7 = xla_tuple %s5, %s6
  %s8 = sld [smem:[#allocation0]]
  $region61: #{tpu_custom_call.1} parent=0
    _
  %s10 = ssub.s32 1, %s8
  %s11 = scalar_select 0, %s10, %s8
  $region1: #{tpu_custom_call.1} parent=0
    #allocation2 [shape = 'u8[8192]{0}', space=vmem, size = 0x2000, scoped, tag = 'output window, operand 1']
    #allocation3 [shape = 's32[2]{0}', space=sflag, size = 0x8, scoped, tag = 'scoped memory for tpu_custom_call.1']
    %12 = vsyncpa [#allocation3], 0
    %s13 = scalar_lea.sflag [#allocation3], 1
    %14 = vsyncpa %s13, 0
    loop: start=0, step=1, limit=4
    $region2: #{tpu_custom_call.1} parent=1 // loop_pre_header
      _
    $region3: #{tpu_custom_call.1} parent=1 // loop_header
      %s16 = sphi 0, %s20
      %p17 = scmp.ge.s32.totalorder %s16, 4
      %s26 = sphi 0, %s28
      %s29 = sphi 0, %s26
      %s30 = sphi 0, %s29
      %s46 = sphi 0, %s30
      %s50 = sphi 0, %s50
      %s52 = sphi 0, %s50
      %s53 = sphi 0, %s52
      %s67 = sphi 0, %s53
      %s71 = sphi 0, %s71
      %s73 = sphi 0, %s71
      %s74 = sphi 0, %s73
      %s88 = sphi 0, %s74
      %s92 = sphi 0, %s92
      %s94 = sphi 0, %s92
      %s95 = sphi 0, %s94
      %s109 = sphi 0, %s95
      %s113 = sphi 0, %s113
      %s115 = sphi 0, %s113
      %s116 = sphi 0, %s115
      %s130 = sphi 0, %s116
      %s136 = sphi 0, %s138
      %s139 = sphi 0, %s136
      %s140 = sphi 0, %s139
      %s156 = sphi 0, %s140
      %s162 = sphi 0, %s164
      %s165 = sphi 0, %s162
      %s166 = sphi 0, %s165
      %s182 = sphi 0, %s166
    $region4: #{tpu_custom_call.1} parent=1 // loop_header_branch
      %19 = sbr.rel (%p17) target = $region8
    $region5: #{tpu_custom_call.1} parent=1 // loop_body
      %s21 = ssub.s32 %s16, 1
      %s22 = ssub.s32 %s16, 2
      %s23 = sadd.s32 %s16, 1
      %s24 = ssub.s32 %s16, %s23
      %p25 = scmp.eq.s32.totalorder %s24, 0
      %s27 = sadd.s32 %s26, 1
      %s28 = scalar_select %p25, %s26, %s27
      %p31 = pneg %p25
      %p32 = scmp.eq.s32.totalorder %s16, 1
      %p33 = por %p31, %p32
      %p34 = scmp.ne.s32.totalorder %s26, %s29
      %p35 = scmp.eq.s32.totalorder %s16, 0
      %p36 = por %p34, %p35
      %p37 = scmp.ne.s32.totalorder %s26, %s29
      %p38 = scmp.eq.s32.totalorder %s21, 1
      %p39 = por %p37, %p38
      %p40 = scmp.ne.s32.totalorder %s29, %s30
      %p41 = scmp.eq.s32.totalorder %s21, 0
      %p42 = por %p40, %p41
      %p43 = scmp.ne.s32.totalorder %s29, %s30
      %p44 = scmp.eq.s32.totalorder %s22, 1
      %p45 = por %p43, %p44
      %p47 = scmp.ne.s32.totalorder %s30, %s46
      %p48 = scmp.eq.s32.totalorder %s22, 0
      %p49 = por %p47, %p48
      %s51 = sadd.s32 %s50, 1
      %p54 = scmp.eq.s32.totalorder %s16, 1
      %p55 = scmp.ne.s32.totalorder %s50, %s52
      %p56 = scmp.eq.s32.totalorder %s16, 0
      %p57 = por %p55, %p56
      %p58 = scmp.ne.s32.totalorder %s50, %s52
      %p59 = scmp.eq.s32.totalorder %s21, 1
      %p60 = por %p58, %p59
      %p61 = scmp.ne.s32.totalorder %s52, %s53
      %p62 = scmp.eq.s32.totalorder %s21, 0
      %p63 = por %p61, %p62
      %p64 = scmp.ne.s32.totalorder %s52, %s53
      %p65 = scmp.eq.s32.totalorder %s22, 1
      %p66 = por %p64, %p65
      %p68 = scmp.ne.s32.totalorder %s53, %s67
      %p69 = scmp.eq.s32.totalorder %s22, 0
      %p70 = por %p68, %p69
      %s72 = sadd.s32 %s71, 1
      %p75 = scmp.eq.s32.totalorder %s16, 1
      %p76 = scmp.ne.s32.totalorder %s71, %s73
      %p77 = scmp.eq.s32.totalorder %s16, 0
      %p78 = por %p76, %p77
      %p79 = scmp.ne.s32.totalorder %s71, %s73
      %p80 = scmp.eq.s32.totalorder %s21, 1
      %p81 = por %p79, %p80
      %p82 = scmp.ne.s32.totalorder %s73, %s74
      %p83 = scmp.eq.s32.totalorder %s21, 0
      %p84 = por %p82, %p83
      %p85 = scmp.ne.s32.totalorder %s73, %s74
      %p86 = scmp.eq.s32.totalorder %s22, 1
      %p87 = por %p85, %p86
      %p89 = scmp.ne.s32.totalorder %s74, %s88
      %p90 = scmp.eq.s32.totalorder %s22, 0
      %p91 = por %p89, %p90
      %s93 = sadd.s32 %s92, 1
      %p96 = scmp.eq.s32.totalorder %s16, 1
      %p97 = scmp.ne.s32.totalorder %s92, %s94
      %p98 = scmp.eq.s32.totalorder %s16, 0
      %p99 = por %p97, %p98
      %p100 = scmp.ne.s32.totalorder %s92, %s94
      %p101 = scmp.eq.s32.totalorder %s21, 1
      %p102 = por %p100, %p101
      %p103 = scmp.ne.s32.totalorder %s94, %s95
      %p104 = scmp.eq.s32.totalorder %s21, 0
      %p105 = por %p103, %p104
      %p106 = scmp.ne.s32.totalorder %s94, %s95
      %p107 = scmp.eq.s32.totalorder %s22, 1
      %p108 = por %p106, %p107
      %p110 = scmp.ne.s32.totalorder %s95, %s109
      %p111 = scmp.eq.s32.totalorder %s22, 0
      %p112 = por %p110, %p111
      %s114 = sadd.s32 %s113, 1
      %p117 = scmp.eq.s32.totalorder %s16, 1
      %p118 = scmp.ne.s32.totalorder %s113, %s115
      %p119 = scmp.eq.s32.totalorder %s16, 0
      %p120 = por %p118, %p119
      %p121 = scmp.ne.s32.totalorder %s113, %s115
      %p122 = scmp.eq.s32.totalorder %s21, 1
      %p123 = por %p121, %p122
      %p124 = scmp.ne.s32.totalorder %s115, %s116
      %p125 = scmp.eq.s32.totalorder %s21, 0
      %p126 = por %p124, %p125
      %p127 = scmp.ne.s32.totalorder %s115, %s116
      %p128 = scmp.eq.s32.totalorder %s22, 1
      %p129 = por %p127, %p128
      %p131 = scmp.ne.s32.totalorder %s116, %s130
      %p132 = scmp.eq.s32.totalorder %s22, 0
      %p133 = por %p131, %p132
      %s134 = ssub.s32 %s16, %s23
      %p135 = scmp.eq.s32.totalorder %s134, 0
      %s137 = sadd.s32 %s136, 1
      %s138 = scalar_select %p135, %s136, %s137
      %p141 = pneg %p135
      %p142 = scmp.eq.s32.totalorder %s16, 1
      %p143 = por %p141, %p142
      %p144 = scmp.ne.s32.totalorder %s136, %s139
      %p145 = scmp.eq.s32.totalorder %s16, 0
      %p146 = por %p144, %p145
      %p147 = scmp.ne.s32.totalorder %s136, %s139
      %p148 = scmp.eq.s32.totalorder %s21, 1
      %p149 = por %p147, %p148
      %p150 = scmp.ne.s32.totalorder %s139, %s140
      %p151 = scmp.eq.s32.totalorder %s21, 0
      %p152 = por %p150, %p151
      %p153 = scmp.ne.s32.totalorder %s139, %s140
      %p154 = scmp.eq.s32.totalorder %s22, 1
      %p155 = por %p153, %p154
      %p157 = scmp.ne.s32.totalorder %s140, %s156
      %p158 = scmp.eq.s32.totalorder %s22, 0
      %p159 = por %p157, %p158
      %s160 = ssub.s32 %s16, %s23
      %p161 = scmp.eq.s32.totalorder %s160, 0
      %s163 = sadd.s32 %s162, 1
      %s164 = scalar_select %p161, %s162, %s163
      %p167 = pneg %p161
      %p168 = scmp.eq.s32.totalorder %s16, 1
      %p169 = por %p167, %p168
      %p170 = scmp.ne.s32.totalorder %s162, %s165
      %p171 = scmp.eq.s32.totalorder %s16, 0
      %p172 = por %p170, %p171
      %p173 = scmp.ne.s32.totalorder %s162, %s165
      %p174 = scmp.eq.s32.totalorder %s21, 1
      %p175 = por %p173, %p174
      %p176 = scmp.ne.s32.totalorder %s165, %s166
      %p177 = scmp.eq.s32.totalorder %s21, 0
      %p178 = por %p176, %p177
      %p179 = scmp.ne.s32.totalorder %s165, %s166
      %p180 = scmp.eq.s32.totalorder %s22, 1
      %p181 = por %p179, %p180
      %p183 = scmp.ne.s32.totalorder %s166, %s182
      %p184 = scmp.eq.s32.totalorder %s22, 0
      %p185 = por %p183, %p184
      %p186 = scmp.le.s32.totalorder 1, %s16
      %p187 = scmp.lt.s32.totalorder %s16, 3
      %p188 = pnand %p186, %p187
      %p189 = pneg %p188
      // Predicated region
      $region9: #{tpu_custom_call.1} parent=5 // pred_check
        _
      $region10: #{tpu_custom_call.1} parent=5 // pred_check_branch
        %191 = sbr.rel (%p188) target = $region12
      $region11: #{tpu_custom_call.1} parent=5 // pred_region
        %s192 = ssub.s32 %s16, 1
        // Predicated region
        $region13: #{tpu_custom_call.1} parent=11 // pred_check
          %p193 = pneg %p63
        $region14: #{tpu_custom_call.1} parent=11 // pred_check_branch
          %195 = sbr.rel (%p193) target = $region16
        $region15: #{tpu_custom_call.1} parent=11 // pred_region
          _
        $region16: #{tpu_custom_call.1} parent=11 // pred_fallthru
          _
        // Predicated region
        $region17: #{tpu_custom_call.1} parent=11 // pred_check
          %p196 = pneg %p84
        $region18: #{tpu_custom_call.1} parent=11 // pred_check_branch
          %198 = sbr.rel (%p196) target = $region20
        $region19: #{tpu_custom_call.1} parent=11 // pred_region
          _
        $region20: #{tpu_custom_call.1} parent=11 // pred_fallthru
          _
        // Predicated region
        $region21: #{tpu_custom_call.1} parent=11 // pred_check
          %p199 = pneg %p105
        $region22: #{tpu_custom_call.1} parent=11 // pred_check_branch
          %201 = sbr.rel (%p199) target = $region24
        $region23: #{tpu_custom_call.1} parent=11 // pred_region
          _
        $region24: #{tpu_custom_call.1} parent=11 // pred_fallthru
          _
        // Predicated region
        $region25: #{tpu_custom_call.1} parent=11 // pred_check
          %p202 = pneg %p126
        $region26: #{tpu_custom_call.1} parent=11 // pred_check_branch
          %204 = sbr.rel (%p202) target = $region28
        $region27: #{tpu_custom_call.1} parent=11 // pred_region
          _
        $region28: #{tpu_custom_call.1} parent=11 // pred_fallthru
          _
      $region12: #{tpu_custom_call.1} parent=5 // pred_fallthru
        _
      %p205 = scmp.lt.s32.totalorder %s16, 2
      // Predicated region
      $region29: #{tpu_custom_call.1} parent=5 // pred_check
        %p206 = pneg %p205
      $region30: #{tpu_custom_call.1} parent=5 // pred_check_branch
        %208 = sbr.rel (%p206) target = $region32
      $region31: #{tpu_custom_call.1} parent=5 // pred_region
        // Predicated region
        $region33: #{tpu_custom_call.1} parent=31 // pred_check
          %p209 = pneg %p36
        $region34: #{tpu_custom_call.1} parent=31 // pred_check_branch
          %211 = sbr.rel (%p209) target = $region36
        $region35: #{tpu_custom_call.1} parent=31 // pred_region
          %p212 = scmp.lt.s32.totalorder %s16, 1
          %s213 = scalar_select %p212, %s16, 1
          %s214 = smul.addr %s213, 17
          %s215 = smul.addr %s214, 8
          %s216 = scalar_lea.vmem %s0, %s215
        $region36: #{tpu_custom_call.1} parent=31 // pred_fallthru
          _
      $region32: #{tpu_custom_call.1} parent=5 // pred_fallthru
        _
      %p217 = scmp.le.s32.totalorder 1, %s16
      %p218 = scmp.lt.s32.totalorder %s16, 3
      %p219 = pnand %p217, %p218
      %p220 = pneg %p219
      // Predicated region
      $region37: #{tpu_custom_call.1} parent=5 // pred_check
        _
      $region38: #{tpu_custom_call.1} parent=5 // pred_check_branch
        %222 = sbr.rel (%p219) target = $region40
      $region39: #{tpu_custom_call.1} parent=5 // pred_region
        %s223 = ssub.s32 %s16, 1
        %p224 = scmp.lt.s32.totalorder %s21, 1
        %s225 = scalar_select %p224, %s21, 1
        %s226 = smul.addr %s225, 17
        %s227 = smul.addr %s226, 8
        %s228 = scalar_lea.vmem %s0, %s227
        %p229 = pneg %p42
        %p230 = pneg %p39
        %p231 = pneg %p63
        %p232 = pneg %p60
        %p233 = pneg %p84
        %p234 = pneg %p81
        %p235 = pneg %p105
        %p236 = pneg %p102
        %p237 = pneg %p126
        %p238 = pneg %p123
        %p239 = pneg %p152
        %p240 = pneg %p149
        %p241 = scmp.lt.s32.totalorder %s21, 1
        %s242 = scalar_select %p241, %s21, 1
        %s243 = smul.addr %s242, 16
        %s244 = smul.addr %s243, 8
        %s245 = scalar_lea.vmem %s5, %s244
        %p246 = pneg %p178
        %p247 = pneg %p175
        %s248 = sand.u32 %s165, 1
        %s249 = scalar_lea.sflag [#allocation3], %s248
        %s250 = sand.u32 %s165, 1
        %s251 = smul.addr %s250, 8
        %s252 = scalar_lea.vmem [#allocation2], %s251
        %p253 = scmp.lt.s32.totalorder %s21, 1
        %s254 = scalar_select %p253, %s21, 1
        %s255 = smul.addr %s254, 17
        %s256 = smul.addr %s255, 8
        %s257 = scalar_lea.vmem %s0, %s256
        %p258 = scmp.lt.s32.totalorder %s21, 1
        %s259 = scalar_select %p258, %s21, 1
        %s260 = smul.addr %s259, 16
        %s261 = smul.addr %s260, 8
        %s262 = scalar_lea.vmem %s5, %s261
        %v263 = vld [vmem:[%s257] sm:$0xff]
        %v264 = vld [vmem:[%s257 + $0x8] sm:$0xff]
        %v265 = vld [vmem:[%s257 + $0x10] sm:$0xff]
        %v266 = vld [vmem:[%s257 + $0x18] sm:$0xff]
        %v267 = vld [vmem:[%s257 + $0x20] sm:$0xff]
        %v268 = vld [vmem:[%s257 + $0x28] sm:$0xff]
        %v269 = vld [vmem:[%s257 + $0x30] sm:$0xff]
        %v270 = vld [vmem:[%s257 + $0x38] sm:$0xff]
        %v271 = vld [vmem:[%s257 + $0x40] sm:$0xff]
        %v272 = vld [vmem:[%s257 + $0x48] sm:$0xff]
        %v273 = vld [vmem:[%s257 + $0x50] sm:$0xff]
        %v274 = vld [vmem:[%s257 + $0x58] sm:$0xff]
        %v275 = vld [vmem:[%s257 + $0x60] sm:$0xff]
        %v276 = vld [vmem:[%s257 + $0x68] sm:$0xff]
        %v277 = vld [vmem:[%s257 + $0x70] sm:$0xff]
        %v278 = vld [vmem:[%s257 + $0x78] sm:$0xff]
        %v279 = vld [vmem:[%s1] sm:$0xff]
        %v280 = vld [vmem:[%s1 + $0x8] sm:$0xff]
        %v281 = vld [vmem:[%s1 + $0x10] sm:$0xff]
        %v282 = vld [vmem:[%s1 + $0x18] sm:$0xff]
        %v283 = vld [vmem:[%s257 + $0x1] sm:$0xff]
        %v284 = vld [vmem:[%s257 + $0x9] sm:$0xff]
        %v285 = vld [vmem:[%s257 + $0x11] sm:$0xff]
        %v286 = vld [vmem:[%s257 + $0x19] sm:$0xff]
        %v287 = vld [vmem:[%s257 + $0x21] sm:$0xff]
        %v288 = vld [vmem:[%s257 + $0x29] sm:$0xff]
        %v289 = vld [vmem:[%s257 + $0x31] sm:$0xff]
        %v290 = vld [vmem:[%s257 + $0x39] sm:$0xff]
        %v291 = vld [vmem:[%s257 + $0x41] sm:$0xff]
        %v292 = vld [vmem:[%s257 + $0x49] sm:$0xff]
        %v293 = vld [vmem:[%s257 + $0x51] sm:$0xff]
        %v294 = vld [vmem:[%s257 + $0x59] sm:$0xff]
        %v295 = vld [vmem:[%s257 + $0x61] sm:$0xff]
        %v296 = vld [vmem:[%s257 + $0x69] sm:$0xff]
        %v297 = vld [vmem:[%s257 + $0x71] sm:$0xff]
        %v298 = vld [vmem:[%s257 + $0x79] sm:$0xff]
        %s299 = scalar_lea.vmem %s1, 32
        %v300 = vld [vmem:[%s299] sm:$0xff]
        %v301 = vld [vmem:[%s299 + $0x8] sm:$0xff]
        %v302 = vld [vmem:[%s299 + $0x10] sm:$0xff]
        %v303 = vld [vmem:[%s299 + $0x18] sm:$0xff]
        %vm304 = vcmask 261120
        %v306 = vsel %vm304, %v283, 0
        %v309 = vsel %vm304, %v284, 0
        %v312 = vsel %vm304, %v285, 0
        %v315 = vsel %vm304, %v286, 0
        %v318 = vsel %vm304, %v287, 0
        %v321 = vsel %vm304, %v288, 0
        %v324 = vsel %vm304, %v289, 0
        %v327 = vsel %vm304, %v290, 0
        %v330 = vsel %vm304, %v291, 0
        %v333 = vsel %vm304, %v292, 0
        %v336 = vsel %vm304, %v293, 0
        %v339 = vsel %vm304, %v294, 0
        %v342 = vsel %vm304, %v295, 0
        %v345 = vsel %vm304, %v296, 0
        %v348 = vsel %vm304, %v297, 0
        %v351 = vsel %vm304, %v298, 0
        %353 = vmatprep.subr.mxu0 0.0
        %354 = vmatpush1.msra.mxu0 %v300
        %355 = vmatprep.subr.mxu0 0.0
        %356 = vmatpush1.msra.mxu0 %v301
        %357 = vmatprep.subr.mxu0 0.0
        %358 = vmatpush1.msra.mxu0 %v302
        %359 = vmatprep.subr.mxu0 0.0
        %360 = vmatpush1.msra.mxu0 %v303
        %361 = vmatprep.subr.mxu0 0.0
        %362 = vmatpush1.msra.mxu0 0.0
        %363 = vmatprep.subr.mxu0 0.0
        %364 = vmatpush1.msra.mxu0 0.0
        %365 = vmatprep.subr.mxu0 0.0
        %366 = vmatpush1.msra.mxu0 0.0
        %367 = vmatprep.subr.mxu0 0.0
        %368 = vmatpush1.msra.mxu0 0.0
        %369 = vmatprep.subr.mxu0 0.0
        %370 = vmatpush1.msra.mxu0 0.0
        %371 = vmatprep.subr.mxu0 0.0
        %372 = vmatpush1.msra.mxu0 0.0
        %373 = vmatprep.subr.mxu0 0.0
        %374 = vmatpush1.msra.mxu0 0.0
        %375 = vmatprep.subr.mxu0 0.0
        %376 = vmatpush1.msra.mxu0 0.0
        %377 = vmatprep.subr.mxu0 0.0
        %378 = vmatpush1.msra.mxu0 0.0
        %379 = vmatprep.subr.mxu0 0.0
        %380 = vmatpush1.msra.mxu0 0.0
        %381 = vmatprep.subr.mxu0 0.0
        %382 = vmatpush1.msra.mxu0 0.0
        %383 = vmatprep.subr.mxu0 0.0
        %384 = vmatpush1.msra.mxu0 0.0
        %385 = vmatprep.subr.mxu0 0.0
        %386 = vmatpush1.msra.mxu0 0.0
        %387 = vmatprep.subr.mxu0 0.0
        %388 = vmatpush1.msra.mxu0 0.0
        %389 = vmatprep.subr.mxu0 0.0
        %390 = vmatpush1.msra.mxu0 0.0
        %391 = vmatprep.subr.mxu0 0.0
        %392 = vmatpush1.msra.mxu0 0.0
        %393 = vmatprep.subr.mxu0 0.0
        %394 = vmatpush1.msra.mxu0 0.0
        %395 = vmatprep.subr.mxu0 0.0
        %396 = vmatpush1.msra.mxu0 0.0
        %397 = vmatprep.subr.mxu0 0.0
        %398 = vmatpush1.msra.mxu0 0.0
        %399 = vmatprep.subr.mxu0 0.0
        %400 = vmatpush1.msra.mxu0 0.0
        %401 = vmatprep.subr.mxu0 0.0
        %402 = vmatpush1.msra.mxu0 0.0
        %403 = vmatprep.subr.mxu0 0.0
        %404 = vmatpush1.msra.mxu0 0.0
        %405 = vmatprep.subr.mxu0 0.0
        %406 = vmatpush1.msra.mxu0 0.0
        %407 = vmatprep.subr.mxu0 0.0
        %408 = vmatpush1.msra.mxu0 0.0
        %409 = vmatprep.subr.mxu0 0.0
        %410 = vmatpush1.msra.mxu0 0.0
        %411 = vmatprep.subr.mxu0 0.0
        %412 = vmatpush1.msra.mxu0 0.0
        %413 = vmatprep.subr.mxu0 0.0
        %414 = vmatpush1.msra.mxu0 0.0
        %415 = vmatprep.subr.mxu0 0.0
        %416 = vmatpush1.msra.mxu0 0.0
        %417 = vmatprep.mubr.f32.mxu0 0.0
        %418 = vmatmul.mubr.f32.gmra.mrb[0].mxu0 %v306
        %v419 = vpop.f32.mrb[0].mxu0
        %v420 = vadd.f32 0.0, %v419
        %v421 = vpop.f32.mrb[0].mxu0
        %422 = vmatprep.mubr.f32.mxu0 0.0
        %423 = vmatmul.mubr.f32.gmra.mrb[0].mxu0 %v309
        %v424 = vpop.f32.mrb[0].mxu0
        %v425 = vadd.f32 0.0, %v424
        %v426 = vpop.f32.mrb[0].mxu0
        %427 = vmatprep.mubr.f32.mxu0 0.0
        %428 = vmatmul.mubr.f32.gmra.mrb[0].mxu0 %v312
        %v429 = vpop.f32.mrb[0].mxu0
        %v430 = vadd.f32 0.0, %v429
        %v431 = vpop.f32.mrb[0].mxu0
        %432 = vmatprep.mubr.f32.mxu0 0.0
        %433 = vmatmul.mubr.f32.gmra.mrb[0].mxu0 %v315
        %v434 = vpop.f32.mrb[0].mxu0
        %v435 = vadd.f32 0.0, %v434
        %v436 = vpop.f32.mrb[0].mxu0
        %437 = vmatprep.mubr.f32.mxu0 0.0
        %438 = vmatmul.mubr.f32.gmra.mrb[0].mxu0 %v318
        %v439 = vpop.f32.mrb[0].mxu0
        %v440 = vadd.f32 0.0, %v439
        %v441 = vpop.f32.mrb[0].mxu0
        %442 = vmatprep.mubr.f32.mxu0 0.0
        %443 = vmatmul.mubr.f32.gmra.mrb[0].mxu0 %v321
        %v444 = vpop.f32.mrb[0].mxu0
        %v445 = vadd.f32 0.0, %v444
        %v446 = vpop.f32.mrb[0].mxu0
        %447 = vmatprep.mubr.f32.mxu0 0.0
        %448 = vmatmul.mubr.f32.gmra.mrb[0].mxu0 %v324
        %v449 = vpop.f32.mrb[0].mxu0
        %v450 = vadd.f32 0.0, %v449
        %v451 = vpop.f32.mrb[0].mxu0
        %452 = vmatprep.mubr.f32.mxu0 0.0
        %453 = vmatmul.mubr.f32.gmra.mrb[0].mxu0 %v327
        %v454 = vpop.f32.mrb[0].mxu0
        %v455 = vadd.f32 0.0, %v454
        %v456 = vpop.f32.mrb[0].mxu0
        %457 = vmatprep.mubr.f32.mxu0 0.0
        %458 = vmatmul.mubr.f32.gmra.mrb[0].mxu0 %v330
        %v459 = vpop.f32.mrb[0].mxu0
        %v460 = vadd.f32 0.0, %v459
        %v461 = vpop.f32.mrb[0].mxu0
        %462 = vmatprep.mubr.f32.mxu0 0.0
        %463 = vmatmul.mubr.f32.gmra.mrb[0].mxu0 %v333
        %v464 = vpop.f32.mrb[0].mxu0
        %v465 = vadd.f32 0.0, %v464
        %v466 = vpop.f32.mrb[0].mxu0
        %467 = vmatprep.mubr.f32.mxu0 0.0
        %468 = vmatmul.mubr.f32.gmra.mrb[0].mxu0 %v336
        %v469 = vpop.f32.mrb[0].mxu0
        %v470 = vadd.f32 0.0, %v469
        %v471 = vpop.f32.mrb[0].mxu0
        %472 = vmatprep.mubr.f32.mxu0 0.0
        %473 = vmatmul.mubr.f32.gmra.mrb[0].mxu0 %v339
        %v474 = vpop.f32.mrb[0].mxu0
        %v475 = vadd.f32 0.0, %v474
        %v476 = vpop.f32.mrb[0].mxu0
        %477 = vmatprep.mubr.f32.mxu0 0.0
        %478 = vmatmul.mubr.f32.gmra.mrb[0].mxu0 %v342
        %v479 = vpop.f32.mrb[0].mxu0
        %v480 = vadd.f32 0.0, %v479
        %v481 = vpop.f32.mrb[0].mxu0
        %482 = vmatprep.mubr.f32.mxu0 0.0
        %483 = vmatmul.mubr.f32.gmra.mrb[0].mxu0 %v345
        %v484 = vpop.f32.mrb[0].mxu0
        %v485 = vadd.f32 0.0, %v484
        %v486 = vpop.f32.mrb[0].mxu0
        %487 = vmatprep.mubr.f32.mxu0 0.0
        %488 = vmatmul.mubr.f32.gmra.mrb[0].mxu0 %v348
        %v489 = vpop.f32.mrb[0].mxu0
        %v490 = vadd.f32 0.0, %v489
        %v491 = vpop.f32.mrb[0].mxu0
        %492 = vmatprep.mubr.f32.mxu0 0.0
        %493 = vmatmul.mubr.f32.gmra.mrb[0].mxu0 %v351
        %v494 = vpop.f32.mrb[0].mxu0
        %v495 = vadd.f32 0.0, %v494
        %v496 = vpop.f32.mrb[0].mxu0
        %497 = vdwg.mxu0
        %v499 = vsel %vm304, %v263, 0
        %v502 = vsel %vm304, %v264, 0
        %v505 = vsel %vm304, %v265, 0
        %v508 = vsel %vm304, %v266, 0
        %v511 = vsel %vm304, %v267, 0
        %v514 = vsel %vm304, %v268, 0
        %v517 = vsel %vm304, %v269, 0
        %v520 = vsel %vm304, %v270, 0
        %v523 = vsel %vm304, %v271, 0
        %v526 = vsel %vm304, %v272, 0
        %v529 = vsel %vm304, %v273, 0
        %v532 = vsel %vm304, %v274, 0
        %v535 = vsel %vm304, %v275, 0
        %v538 = vsel %vm304, %v276, 0
        %v541 = vsel %vm304, %v277, 0
        %v544 = vsel %vm304, %v278, 0
        %546 = vmatprep.subr.mxu0 0.0
        %547 = vmatpush1.msra.mxu0 %v279
        %548 = vmatprep.subr.mxu0 0.0
        %549 = vmatpush1.msra.mxu0 %v280
        %550 = vmatprep.subr.mxu0 0.0
        %551 = vmatpush1.msra.mxu0 %v281
        %552 = vmatprep.subr.mxu0 0.0
        %553 = vmatpush1.msra.mxu0 %v282
        %554 = vmatprep.subr.mxu0 0.0
        %555 = vmatpush1.msra.mxu0 0.0
        %556 = vmatprep.subr.mxu0 0.0
        %557 = vmatpush1.msra.mxu0 0.0
        %558 = vmatprep.subr.mxu0 0.0
        %559 = vmatpush1.msra.mxu0 0.0
        %560 = vmatprep.subr.mxu0 0.0
        %561 = vmatpush1.msra.mxu0 0.0
        %562 = vmatprep.subr.mxu0 0.0
        %563 = vmatpush1.msra.mxu0 0.0
        %564 = vmatprep.subr.mxu0 0.0
        %565 = vmatpush1.msra.mxu0 0.0
        %566 = vmatprep.subr.mxu0 0.0
        %567 = vmatpush1.msra.mxu0 0.0
        %568 = vmatprep.subr.mxu0 0.0
        %569 = vmatpush1.msra.mxu0 0.0
        %570 = vmatprep.subr.mxu0 0.0
        %571 = vmatpush1.msra.mxu0 0.0
        %572 = vmatprep.subr.mxu0 0.0
        %573 = vmatpush1.msra.mxu0 0.0
        %574 = vmatprep.subr.mxu0 0.0
        %575 = vmatpush1.msra.mxu0 0.0
        %576 = vmatprep.subr.mxu0 0.0
        %577 = vmatpush1.msra.mxu0 0.0
        %578 = vmatprep.subr.mxu0 0.0
        %579 = vmatpush1.msra.mxu0 0.0
        %580 = vmatprep.subr.mxu0 0.0
        %581 = vmatpush1.msra.mxu0 0.0
        %582 = vmatprep.subr.mxu0 0.0
        %583 = vmatpush1.msra.mxu0 0.0
        %584 = vmatprep.subr.mxu0 0.0
        %585 = vmatpush1.msra.mxu0 0.0
        %586 = vmatprep.subr.mxu0 0.0
        %587 = vmatpush1.msra.mxu0 0.0
        %588 = vmatprep.subr.mxu0 0.0
        %589 = vmatpush1.msra.mxu0 0.0
        %590 = vmatprep.subr.mxu0 0.0
        %591 = vmatpush1.msra.mxu0 0.0
        %592 = vmatprep.subr.mxu0 0.0
        %593 = vmatpush1.msra.mxu0 0.0
        %594 = vmatprep.subr.mxu0 0.0
        %595 = vmatpush1.msra.mxu0 0.0
        %596 = vmatprep.subr.mxu0 0.0
        %597 = vmatpush1.msra.mxu0 0.0
        %598 = vmatprep.subr.mxu0 0.0
        %599 = vmatpush1.msra.mxu0 0.0
        %600 = vmatprep.subr.mxu0 0.0
        %601 = vmatpush1.msra.mxu0 0.0
        %602 = vmatprep.subr.mxu0 0.0
        %603 = vmatpush1.msra.mxu0 0.0
        %604 = vmatprep.subr.mxu0 0.0
        %605 = vmatpush1.msra.mxu0 0.0
        %606 = vmatprep.subr.mxu0 0.0
        %607 = vmatpush1.msra.mxu0 0.0
        %608 = vmatprep.subr.mxu0 0.0
        %609 = vmatpush1.msra.mxu0 0.0
        %610 = vmatprep.mubr.f32.mxu0 0.0
        %611 = vmatmul.mubr.f32.gmra.mrb[0].mxu0 %v499
        %v612 = vpop.f32.mrb[0].mxu0
        %v613 = vadd.f32 %v420, %v612
        %v614 = vpop.f32.mrb[0].mxu0
        %615 = vmatprep.mubr.f32.mxu0 0.0
        %616 = vmatmul.mubr.f32.gmra.mrb[0].mxu0 %v502
        %v617 = vpop.f32.mrb[0].mxu0
        %v618 = vadd.f32 %v425, %v617
        %v619 = vpop.f32.mrb[0].mxu0
        %620 = vmatprep.mubr.f32.mxu0 0.0
        %621 = vmatmul.mubr.f32.gmra.mrb[0].mxu0 %v505
        %v622 = vpop.f32.mrb[0].mxu0
        %v623 = vadd.f32 %v430, %v622
        %v624 = vpop.f32.mrb[0].mxu0
        %625 = vmatprep.mubr.f32.mxu0 0.0
        %626 = vmatmul.mubr.f32.gmra.mrb[0].mxu0 %v508
        %v627 = vpop.f32.mrb[0].mxu0
        %v628 = vadd.f32 %v435, %v627
        %v629 = vpop.f32.mrb[0].mxu0
        %630 = vmatprep.mubr.f32.mxu0 0.0
        %631 = vmatmul.mubr.f32.gmra.mrb[0].mxu0 %v511
        %v632 = vpop.f32.mrb[0].mxu0
        %v633 = vadd.f32 %v440, %v632
        %v634 = vpop.f32.mrb[0].mxu0
        %635 = vmatprep.mubr.f32.mxu0 0.0
        %636 = vmatmul.mubr.f32.gmra.mrb[0].mxu0 %v514
        %v637 = vpop.f32.mrb[0].mxu0
        %v638 = vadd.f32 %v445, %v637
        %v639 = vpop.f32.mrb[0].mxu0
        %640 = vmatprep.mubr.f32.mxu0 0.0
        %641 = vmatmul.mubr.f32.gmra.mrb[0].mxu0 %v517
        %v642 = vpop.f32.mrb[0].mxu0
        %v643 = vadd.f32 %v450, %v642
        %v644 = vpop.f32.mrb[0].mxu0
        %645 = vmatprep.mubr.f32.mxu0 0.0
        %646 = vmatmul.mubr.f32.gmra.mrb[0].mxu0 %v520
        %v647 = vpop.f32.mrb[0].mxu0
        %v648 = vadd.f32 %v455, %v647
        %v649 = vpop.f32.mrb[0].mxu0
        %650 = vmatprep.mubr.f32.mxu0 0.0
        %651 = vmatmul.mubr.f32.gmra.mrb[0].mxu0 %v523
        %v652 = vpop.f32.mrb[0].mxu0
        %v653 = vadd.f32 %v460, %v652
        %v654 = vpop.f32.mrb[0].mxu0
        %655 = vmatprep.mubr.f32.mxu0 0.0
        %656 = vmatmul.mubr.f32.gmra.mrb[0].mxu0 %v526
        %v657 = vpop.f32.mrb[0].mxu0
        %v658 = vadd.f32 %v465, %v657
        %v659 = vpop.f32.mrb[0].mxu0
        %660 = vmatprep.mubr.f32.mxu0 0.0
        %661 = vmatmul.mubr.f32.gmra.mrb[0].mxu0 %v529
        %v662 = vpop.f32.mrb[0].mxu0
        %v663 = vadd.f32 %v470, %v662
        %v664 = vpop.f32.mrb[0].mxu0
        %665 = vmatprep.mubr.f32.mxu0 0.0
        %666 = vmatmul.mubr.f32.gmra.mrb[0].mxu0 %v532
        %v667 = vpop.f32.mrb[0].mxu0
        %v668 = vadd.f32 %v475, %v667
        %v669 = vpop.f32.mrb[0].mxu0
        %670 = vmatprep.mubr.f32.mxu0 0.0
        %671 = vmatmul.mubr.f32.gmra.mrb[0].mxu0 %v535
        %v672 = vpop.f32.mrb[0].mxu0
        %v673 = vadd.f32 %v480, %v672
        %v674 = vpop.f32.mrb[0].mxu0
        %675 = vmatprep.mubr.f32.mxu0 0.0
        %676 = vmatmul.mubr.f32.gmra.mrb[0].mxu0 %v538
        %v677 = vpop.f32.mrb[0].mxu0
        %v678 = vadd.f32 %v485, %v677
        %v679 = vpop.f32.mrb[0].mxu0
        %680 = vmatprep.mubr.f32.mxu0 0.0
        %681 = vmatmul.mubr.f32.gmra.mrb[0].mxu0 %v541
        %v682 = vpop.f32.mrb[0].mxu0
        %v683 = vadd.f32 %v490, %v682
        %v684 = vpop.f32.mrb[0].mxu0
        %685 = vmatprep.mubr.f32.mxu0 0.0
        %686 = vmatmul.mubr.f32.gmra.mrb[0].mxu0 %v544
        %v687 = vpop.f32.mrb[0].mxu0
        %v688 = vadd.f32 %v495, %v687
        %v689 = vpop.f32.mrb[0].mxu0
        %690 = vdwg.mxu0
        %v691 = vld [vmem:[%s257 + $0x2] sm:$0xff]
        %v692 = vld [vmem:[%s257 + $0xa] sm:$0xff]
        %v693 = vld [vmem:[%s257 + $0x12] sm:$0xff]
        %v694 = vld [vmem:[%s257 + $0x1a] sm:$0xff]
        %v695 = vld [vmem:[%s257 + $0x22] sm:$0xff]
        %v696 = vld [vmem:[%s257 + $0x2a] sm:$0xff]
        %v697 = vld [vmem:[%s257 + $0x32] sm:$0xff]
        %v698 = vld [vmem:[%s257 + $0x3a] sm:$0xff]
        %v699 = vld [vmem:[%s257 + $0x42] sm:$0xff]
        %v700 = vld [vmem:[%s257 + $0x4a] sm:$0xff]
        %v701 = vld [vmem:[%s257 + $0x52] sm:$0xff]
        %v702 = vld [vmem:[%s257 + $0x5a] sm:$0xff]
        %v703 = vld [vmem:[%s257 + $0x62] sm:$0xff]
        %v704 = vld [vmem:[%s257 + $0x6a] sm:$0xff]
        %v705 = vld [vmem:[%s257 + $0x72] sm:$0xff]
        %v706 = vld [vmem:[%s257 + $0x7a] sm:$0xff]
        %s707 = scalar_lea.vmem %s1, 64
        %v708 = vld [vmem:[%s707] sm:$0xff]
        %v709 = vld [vmem:[%s707 + $0x8] sm:$0xff]
        %v710 = vld [vmem:[%s707 + $0x10] sm:$0xff]
        %v711 = vld [vmem:[%s707 + $0x18] sm:$0xff]
        %v713 = vsel %vm304, %v691, 0
        %v716 = vsel %vm304, %v692, 0
        %v719 = vsel %vm304, %v693, 0
        %v722 = vsel %vm304, %v694, 0
        %v725 = vsel %vm304, %v695, 0
        %v728 = vsel %vm304, %v696, 0
        %v731 = vsel %vm304, %v697, 0
        %v734 = vsel %vm304, %v698, 0
        %v737 = vsel %vm304, %v699, 0
        %v740 = vsel %vm304, %v700, 0
        %v743 = vsel %vm304, %v701, 0
        %v746 = vsel %vm304, %v702, 0
        %v749 = vsel %vm304, %v703, 0
        %v752 = vsel %vm304, %v704, 0
        %v755 = vsel %vm304, %v705, 0
        %v758 = vsel %vm304, %v706, 0
        %760 = vmatprep.subr.mxu0 0.0
        %761 = vmatpush1.msra.mxu0 %v708
        %762 = vmatprep.subr.mxu0 0.0
        %763 = vmatpush1.msra.mxu0 %v709
        %764 = vmatprep.subr.mxu0 0.0
        %765 = vmatpush1.msra.mxu0 %v710
        %766 = vmatprep.subr.mxu0 0.0
        %767 = vmatpush1.msra.mxu0 %v711
        %768 = vmatprep.subr.mxu0 0.0
        %769 = vmatpush1.msra.mxu0 0.0
        %770 = vmatprep.subr.mxu0 0.0
        %771 = vmatpush1.msra.mxu0 0.0
        %772 = vmatprep.subr.mxu0 0.0
        %773 = vmatpush1.msra.mxu0 0.0
        %774 = vmatprep.subr.mxu0 0.0
        %775 = vmatpush1.msra.mxu0 0.0
        %776 = vmatprep.subr.mxu0 0.0
        %777 = vmatpush1.msra.mxu0 0.0
        %778 = vmatprep.subr.mxu0 0.0
        %779 = vmatpush1.msra.mxu0 0.0
        %780 = vmatprep.subr.mxu0 0.0
        %781 = vmatpush1.msra.mxu0 0.0
        %782 = vmatprep.subr.mxu0 0.0
        %783 = vmatpush1.msra.mxu0 0.0
        %784 = vmatprep.subr.mxu0 0.0
        %785 = vmatpush1.msra.mxu0 0.0
        %786 = vmatprep.subr.mxu0 0.0
        %787 = vmatpush1.msra.mxu0 0.0
        %788 = vmatprep.subr.mxu0 0.0
        %789 = vmatpush1.msra.mxu0 0.0
        %790 = vmatprep.subr.mxu0 0.0
        %791 = vmatpush1.msra.mxu0 0.0
        %792 = vmatprep.subr.mxu0 0.0
        %793 = vmatpush1.msra.mxu0 0.0
        %794 = vmatprep.subr.mxu0 0.0
        %795 = vmatpush1.msra.mxu0 0.0
        %796 = vmatprep.subr.mxu0 0.0
        %797 = vmatpush1.msra.mxu0 0.0
        %798 = vmatprep.subr.mxu0 0.0
        %799 = vmatpush1.msra.mxu0 0.0
        %800 = vmatprep.subr.mxu0 0.0
        %801 = vmatpush1.msra.mxu0 0.0
        %802 = vmatprep.subr.mxu0 0.0
        %803 = vmatpush1.msra.mxu0 0.0
        %804 = vmatprep.subr.mxu0 0.0
        %805 = vmatpush1.msra.mxu0 0.0
        %806 = vmatprep.subr.mxu0 0.0
        %807 = vmatpush1.msra.mxu0 0.0
        %808 = vmatprep.subr.mxu0 0.0
        %809 = vmatpush1.msra.mxu0 0.0
        %810 = vmatprep.subr.mxu0 0.0
        %811 = vmatpush1.msra.mxu0 0.0
        %812 = vmatprep.subr.mxu0 0.0
        %813 = vmatpush1.msra.mxu0 0.0
        %814 = vmatprep.subr.mxu0 0.0
        %815 = vmatpush1.msra.mxu0 0.0
        %816 = vmatprep.subr.mxu0 0.0
        %817 = vmatpush1.msra.mxu0 0.0
        %818 = vmatprep.subr.mxu0 0.0
        %819 = vmatpush1.msra.mxu0 0.0
        %820 = vmatprep.subr.mxu0 0.0
        %821 = vmatpush1.msra.mxu0 0.0
        %822 = vmatprep.subr.mxu0 0.0
        %823 = vmatpush1.msra.mxu0 0.0
        %824 = vmatprep.mubr.f32.mxu0 0.0
        %825 = vmatmul.mubr.f32.gmra.mrb[0].mxu0 %v713
        %v826 = vpop.f32.mrb[0].mxu0
        %v827 = vadd.f32 0.0, %v826
        %v828 = vpop.f32.mrb[0].mxu0
        %829 = vmatprep.mubr.f32.mxu0 0.0
        %830 = vmatmul.mubr.f32.gmra.mrb[0].mxu0 %v716
        %v831 = vpop.f32.mrb[0].mxu0
        %v832 = vadd.f32 0.0, %v831
        %v833 = vpop.f32.mrb[0].mxu0
        %834 = vmatprep.mubr.f32.mxu0 0.0
        %835 = vmatmul.mubr.f32.gmra.mrb[0].mxu0 %v719
        %v836 = vpop.f32.mrb[0].mxu0
        %v837 = vadd.f32 0.0, %v836
        %v838 = vpop.f32.mrb[0].mxu0
        %839 = vmatprep.mubr.f32.mxu0 0.0
        %840 = vmatmul.mubr.f32.gmra.mrb[0].mxu0 %v722
        %v841 = vpop.f32.mrb[0].mxu0
        %v842 = vadd.f32 0.0, %v841
        %v843 = vpop.f32.mrb[0].mxu0
        %844 = vmatprep.mubr.f32.mxu0 0.0
        %845 = vmatmul.mubr.f32.gmra.mrb[0].mxu0 %v725
        %v846 = vpop.f32.mrb[0].mxu0
        %v847 = vadd.f32 0.0, %v846
        %v848 = vpop.f32.mrb[0].mxu0
        %849 = vmatprep.mubr.f32.mxu0 0.0
        %850 = vmatmul.mubr.f32.gmra.mrb[0].mxu0 %v728
        %v851 = vpop.f32.mrb[0].mxu0
        %v852 = vadd.f32 0.0, %v851
        %v853 = vpop.f32.mrb[0].mxu0
        %854 = vmatprep.mubr.f32.mxu0 0.0
        %855 = vmatmul.mubr.f32.gmra.mrb[0].mxu0 %v731
        %v856 = vpop.f32.mrb[0].mxu0
        %v857 = vadd.f32 0.0, %v856
        %v858 = vpop.f32.mrb[0].mxu0
        %859 = vmatprep.mubr.f32.mxu0 0.0
        %860 = vmatmul.mubr.f32.gmra.mrb[0].mxu0 %v734
        %v861 = vpop.f32.mrb[0].mxu0
        %v862 = vadd.f32 0.0, %v861
        %v863 = vpop.f32.mrb[0].mxu0
        %864 = vmatprep.mubr.f32.mxu0 0.0
        %865 = vmatmul.mubr.f32.gmra.mrb[0].mxu0 %v737
        %v866 = vpop.f32.mrb[0].mxu0
        %v867 = vadd.f32 0.0, %v866
        %v868 = vpop.f32.mrb[0].mxu0
        %869 = vmatprep.mubr.f32.mxu0 0.0
        %870 = vmatmul.mubr.f32.gmra.mrb[0].mxu0 %v740
        %v871 = vpop.f32.mrb[0].mxu0
        %v872 = vadd.f32 0.0, %v871
        %v873 = vpop.f32.mrb[0].mxu0
        %874 = vmatprep.mubr.f32.mxu0 0.0
        %875 = vmatmul.mubr.f32.gmra.mrb[0].mxu0 %v743
        %v876 = vpop.f32.mrb[0].mxu0
        %v877 = vadd.f32 0.0, %v876
        %v878 = vpop.f32.mrb[0].mxu0
        %879 = vmatprep.mubr.f32.mxu0 0.0
        %880 = vmatmul.mubr.f32.gmra.mrb[0].mxu0 %v746
        %v881 = vpop.f32.mrb[0].mxu0
        %v882 = vadd.f32 0.0, %v881
        %v883 = vpop.f32.mrb[0].mxu0
        %884 = vmatprep.mubr.f32.mxu0 0.0
        %885 = vmatmul.mubr.f32.gmra.mrb[0].mxu0 %v749
        %v886 = vpop.f32.mrb[0].mxu0
        %v887 = vadd.f32 0.0, %v886
        %v888 = vpop.f32.mrb[0].mxu0
        %889 = vmatprep.mubr.f32.mxu0 0.0
        %890 = vmatmul.mubr.f32.gmra.mrb[0].mxu0 %v752
        %v891 = vpop.f32.mrb[0].mxu0
        %v892 = vadd.f32 0.0, %v891
        %v893 = vpop.f32.mrb[0].mxu0
        %894 = vmatprep.mubr.f32.mxu0 0.0
        %895 = vmatmul.mubr.f32.gmra.mrb[0].mxu0 %v755
        %v896 = vpop.f32.mrb[0].mxu0
        %v897 = vadd.f32 0.0, %v896
        %v898 = vpop.f32.mrb[0].mxu0
        %899 = vmatprep.mubr.f32.mxu0 0.0
        %900 = vmatmul.mubr.f32.gmra.mrb[0].mxu0 %v758
        %v901 = vpop.f32.mrb[0].mxu0
        %v902 = vadd.f32 0.0, %v901
        %v903 = vpop.f32.mrb[0].mxu0
        %904 = vdwg.mxu0
        %v905 = vadd.f32 %v613, %v827
        %v906 = vadd.f32 %v618, %v832
        %v907 = vadd.f32 %v623, %v837
        %v908 = vadd.f32 %v628, %v842
        %v909 = vadd.f32 %v633, %v847
        %v910 = vadd.f32 %v638, %v852
        %v911 = vadd.f32 %v643, %v857
        %v912 = vadd.f32 %v648, %v862
        %v913 = vadd.f32 %v653, %v867
        %v914 = vadd.f32 %v658, %v872
        %v915 = vadd.f32 %v663, %v877
        %v916 = vadd.f32 %v668, %v882
        %v917 = vadd.f32 %v673, %v887
        %v918 = vadd.f32 %v678, %v892
        %v919 = vadd.f32 %v683, %v897
        %v920 = vadd.f32 %v688, %v902
        %v921 = vld [vmem:[%s2] sm:$0x1]
        %v923 = vlaneseq
        %v924 = vshrl.u32 %v923, 7
        %v925 = vsub.s32 0, %v924
        %v926 = vrot.slane %v921, %v925
        %v928 = vadd.f32 %v905, %v926
        %v929 = vadd.f32 %v906, %v926
        %v930 = vadd.f32 %v907, %v926
        %v931 = vadd.f32 %v908, %v926
        %v932 = vadd.f32 %v909, %v926
        %v933 = vadd.f32 %v910, %v926
        %v934 = vadd.f32 %v911, %v926
        %v935 = vadd.f32 %v912, %v926
        %v936 = vadd.f32 %v913, %v926
        %v937 = vadd.f32 %v914, %v926
        %v938 = vadd.f32 %v915, %v926
        %v939 = vadd.f32 %v916, %v926
        %v940 = vadd.f32 %v917, %v926
        %v941 = vadd.f32 %v918, %v926
        %v942 = vadd.f32 %v919, %v926
        %v943 = vadd.f32 %v920, %v926
        %v944 = vmax.f32 %v928, 0.0
        %v945 = vmax.f32 %v929, 0.0
        %v946 = vmax.f32 %v930, 0.0
        %v947 = vmax.f32 %v931, 0.0
        %v948 = vmax.f32 %v932, 0.0
        %v949 = vmax.f32 %v933, 0.0
        %v950 = vmax.f32 %v934, 0.0
        %v951 = vmax.f32 %v935, 0.0
        %v952 = vmax.f32 %v936, 0.0
        %v953 = vmax.f32 %v937, 0.0
        %v954 = vmax.f32 %v938, 0.0
        %v955 = vmax.f32 %v939, 0.0
        %v956 = vmax.f32 %v940, 0.0
        %v957 = vmax.f32 %v941, 0.0
        %v958 = vmax.f32 %v942, 0.0
        %v959 = vmax.f32 %v943, 0.0
        %v960 = vld [vmem:[%s3] sm:$0xff]
        %v961 = vld [vmem:[%s3 + $0x8] sm:$0xff]
        %v962 = vld [vmem:[%s3 + $0x10] sm:$0xff]
        %v963 = vld [vmem:[%s3 + $0x18] sm:$0xff]
        %v964 = vld [vmem:[%s3 + $0x20] sm:$0xff]
        %v965 = vld [vmem:[%s3 + $0x28] sm:$0xff]
        %v966 = vld [vmem:[%s3 + $0x30] sm:$0xff]
        %v967 = vld [vmem:[%s3 + $0x38] sm:$0xff]
        %v968 = vld [vmem:[%s4] sm:$0x1]
        %v970 = vlaneseq
        %v971 = vshrl.u32 %v970, 7
        %v972 = vsub.s32 0, %v971
        %v973 = vrot.slane %v968, %v972
        %vm975 = vcmask 523264
        %v977 = vsel %vm975, %v944, 0
        %v980 = vsel %vm975, %v945, 0
        %v983 = vsel %vm975, %v946, 0
        %v986 = vsel %vm975, %v947, 0
        %v989 = vsel %vm975, %v948, 0
        %v992 = vsel %vm975, %v949, 0
        %v995 = vsel %vm975, %v950, 0
        %v998 = vsel %vm975, %v951, 0
        %v1001 = vsel %vm975, %v952, 0
        %v1004 = vsel %vm975, %v953, 0
        %v1007 = vsel %vm975, %v954, 0
        %v1010 = vsel %vm975, %v955, 0
        %v1013 = vsel %vm975, %v956, 0
        %v1016 = vsel %vm975, %v957, 0
        %v1019 = vsel %vm975, %v958, 0
        %v1022 = vsel %vm975, %v959, 0
        %1024 = vmatprep.subr.mxu0 0.0
        %1025 = vmatpush1.msra.mxu0 %v960
        %1026 = vmatprep.subr.mxu0 0.0
        %1027 = vmatpush1.msra.mxu0 %v961
        %1028 = vmatprep.subr.mxu0 0.0
        %1029 = vmatpush1.msra.mxu0 %v962
        %1030 = vmatprep.subr.mxu0 0.0
        %1031 = vmatpush1.msra.mxu0 %v963
        %1032 = vmatprep.subr.mxu0 0.0
        %1033 = vmatpush1.msra.mxu0 %v964
        %1034 = vmatprep.subr.mxu0 0.0
        %1035 = vmatpush1.msra.mxu0 %v965
        %1036 = vmatprep.subr.mxu0 0.0
        %1037 = vmatpush1.msra.mxu0 %v966
        %1038 = vmatprep.subr.mxu0 0.0
        %1039 = vmatpush1.msra.mxu0 %v967
        %1040 = vmatprep.subr.mxu0 0.0
        %1041 = vmatpush1.msra.mxu0 0.0
        %1042 = vmatprep.subr.mxu0 0.0
        %1043 = vmatpush1.msra.mxu0 0.0
        %1044 = vmatprep.subr.mxu0 0.0
        %1045 = vmatpush1.msra.mxu0 0.0
        %1046 = vmatprep.subr.mxu0 0.0
        %1047 = vmatpush1.msra.mxu0 0.0
        %1048 = vmatprep.subr.mxu0 0.0
        %1049 = vmatpush1.msra.mxu0 0.0
        %1050 = vmatprep.subr.mxu0 0.0
        %1051 = vmatpush1.msra.mxu0 0.0
        %1052 = vmatprep.subr.mxu0 0.0
        %1053 = vmatpush1.msra.mxu0 0.0
        %1054 = vmatprep.subr.mxu0 0.0
        %1055 = vmatpush1.msra.mxu0 0.0
        %1056 = vmatprep.subr.mxu0 0.0
        %1057 = vmatpush1.msra.mxu0 0.0
        %1058 = vmatprep.subr.mxu0 0.0
        %1059 = vmatpush1.msra.mxu0 0.0
        %1060 = vmatprep.subr.mxu0 0.0
        %1061 = vmatpush1.msra.mxu0 0.0
        %1062 = vmatprep.subr.mxu0 0.0
        %1063 = vmatpush1.msra.mxu0 0.0
        %1064 = vmatprep.subr.mxu0 0.0
        %1065 = vmatpush1.msra.mxu0 0.0
        %1066 = vmatprep.subr.mxu0 0.0
        %1067 = vmatpush1.msra.mxu0 0.0
        %1068 = vmatprep.subr.mxu0 0.0
        %1069 = vmatpush1.msra.mxu0 0.0
        %1070 = vmatprep.subr.mxu0 0.0
        %1071 = vmatpush1.msra.mxu0 0.0
        %1072 = vmatprep.subr.mxu0 0.0
        %1073 = vmatpush1.msra.mxu0 0.0
        %1074 = vmatprep.subr.mxu0 0.0
        %1075 = vmatpush1.msra.mxu0 0.0
        %1076 = vmatprep.subr.mxu0 0.0
        %1077 = vmatpush1.msra.mxu0 0.0
        %1078 = vmatprep.subr.mxu0 0.0
        %1079 = vmatpush1.msra.mxu0 0.0
        %1080 = vmatprep.subr.mxu0 0.0
        %1081 = vmatpush1.msra.mxu0 0.0
        %1082 = vmatprep.subr.mxu0 0.0
        %1083 = vmatpush1.msra.mxu0 0.0
        %1084 = vmatprep.subr.mxu0 0.0
        %1085 = vmatpush1.msra.mxu0 0.0
        %1086 = vmatprep.subr.mxu0 0.0
        %1087 = vmatpush1.msra.mxu0 0.0
        %1088 = vmatprep.mubr.f32.mxu0 0.0
        %1089 = vmatmul.mubr.f32.gmra.mrb[0].mxu0 %v977
        %v1090 = vpop.f32.mrb[0].mxu0
        %v1091 = vadd.f32 %v973, %v1090
        %v1092 = vpop.f32.mrb[0].mxu0
        %1093 = vmatprep.mubr.f32.mxu0 0.0
        %1094 = vmatmul.mubr.f32.gmra.mrb[0].mxu0 %v980
        %v1095 = vpop.f32.mrb[0].mxu0
        %v1096 = vadd.f32 %v973, %v1095
        %v1097 = vpop.f32.mrb[0].mxu0
        %1098 = vmatprep.mubr.f32.mxu0 0.0
        %1099 = vmatmul.mubr.f32.gmra.mrb[0].mxu0 %v983
        %v1100 = vpop.f32.mrb[0].mxu0
        %v1101 = vadd.f32 %v973, %v1100
        %v1102 = vpop.f32.mrb[0].mxu0
        %1103 = vmatprep.mubr.f32.mxu0 0.0
        %1104 = vmatmul.mubr.f32.gmra.mrb[0].mxu0 %v986
        %v1105 = vpop.f32.mrb[0].mxu0
        %v1106 = vadd.f32 %v973, %v1105
        %v1107 = vpop.f32.mrb[0].mxu0
        %1108 = vmatprep.mubr.f32.mxu0 0.0
        %1109 = vmatmul.mubr.f32.gmra.mrb[0].mxu0 %v989
        %v1110 = vpop.f32.mrb[0].mxu0
        %v1111 = vadd.f32 %v973, %v1110
        %v1112 = vpop.f32.mrb[0].mxu0
        %1113 = vmatprep.mubr.f32.mxu0 0.0
        %1114 = vmatmul.mubr.f32.gmra.mrb[0].mxu0 %v992
        %v1115 = vpop.f32.mrb[0].mxu0
        %v1116 = vadd.f32 %v973, %v1115
        %v1117 = vpop.f32.mrb[0].mxu0
        %1118 = vmatprep.mubr.f32.mxu0 0.0
        %1119 = vmatmul.mubr.f32.gmra.mrb[0].mxu0 %v995
        %v1120 = vpop.f32.mrb[0].mxu0
        %v1121 = vadd.f32 %v973, %v1120
        %v1122 = vpop.f32.mrb[0].mxu0
        %1123 = vmatprep.mubr.f32.mxu0 0.0
        %1124 = vmatmul.mubr.f32.gmra.mrb[0].mxu0 %v998
        %v1125 = vpop.f32.mrb[0].mxu0
        %v1126 = vadd.f32 %v973, %v1125
        %v1127 = vpop.f32.mrb[0].mxu0
        %1128 = vmatprep.mubr.f32.mxu0 0.0
        %1129 = vmatmul.mubr.f32.gmra.mrb[0].mxu0 %v1001
        %v1130 = vpop.f32.mrb[0].mxu0
        %v1131 = vadd.f32 %v973, %v1130
        %v1132 = vpop.f32.mrb[0].mxu0
        %1133 = vmatprep.mubr.f32.mxu0 0.0
        %1134 = vmatmul.mubr.f32.gmra.mrb[0].mxu0 %v1004
        %v1135 = vpop.f32.mrb[0].mxu0
        %v1136 = vadd.f32 %v973, %v1135
        %v1137 = vpop.f32.mrb[0].mxu0
        %1138 = vmatprep.mubr.f32.mxu0 0.0
        %1139 = vmatmul.mubr.f32.gmra.mrb[0].mxu0 %v1007
        %v1140 = vpop.f32.mrb[0].mxu0
        %v1141 = vadd.f32 %v973, %v1140
        %v1142 = vpop.f32.mrb[0].mxu0
        %1143 = vmatprep.mubr.f32.mxu0 0.0
        %1144 = vmatmul.mubr.f32.gmra.mrb[0].mxu0 %v1010
        %v1145 = vpop.f32.mrb[0].mxu0
        %v1146 = vadd.f32 %v973, %v1145
        %v1147 = vpop.f32.mrb[0].mxu0
        %1148 = vmatprep.mubr.f32.mxu0 0.0
        %1149 = vmatmul.mubr.f32.gmra.mrb[0].mxu0 %v1013
        %v1150 = vpop.f32.mrb[0].mxu0
        %v1151 = vadd.f32 %v973, %v1150
        %v1152 = vpop.f32.mrb[0].mxu0
        %1153 = vmatprep.mubr.f32.mxu0 0.0
        %1154 = vmatmul.mubr.f32.gmra.mrb[0].mxu0 %v1016
        %v1155 = vpop.f32.mrb[0].mxu0
        %v1156 = vadd.f32 %v973, %v1155
        %v1157 = vpop.f32.mrb[0].mxu0
        %1158 = vmatprep.mubr.f32.mxu0 0.0
        %1159 = vmatmul.mubr.f32.gmra.mrb[0].mxu0 %v1019
        %v1160 = vpop.f32.mrb[0].mxu0
        %v1161 = vadd.f32 %v973, %v1160
        %v1162 = vpop.f32.mrb[0].mxu0
        %1163 = vmatprep.mubr.f32.mxu0 0.0
        %1164 = vmatmul.mubr.f32.gmra.mrb[0].mxu0 %v1022
        %v1165 = vpop.f32.mrb[0].mxu0
        %v1166 = vadd.f32 %v973, %v1165
        %v1167 = vpop.f32.mrb[0].mxu0
        %1168 = vdwg.mxu0
        %vm1169 = vcmask 130048
        %1170 = vst.msk [vmem:[%s262] sm:$0xff] %vm1169, %v1091
        %1171 = vst.msk [vmem:[%s262 + $0x8] sm:$0xff] %vm1169, %v1096
        %1172 = vst.msk [vmem:[%s262 + $0x10] sm:$0xff] %vm1169, %v1101
        %1173 = vst.msk [vmem:[%s262 + $0x18] sm:$0xff] %vm1169, %v1106
        %1174 = vst.msk [vmem:[%s262 + $0x20] sm:$0xff] %vm1169, %v1111
        %1175 = vst.msk [vmem:[%s262 + $0x28] sm:$0xff] %vm1169, %v1116
        %1176 = vst.msk [vmem:[%s262 + $0x30] sm:$0xff] %vm1169, %v1121
        %1177 = vst.msk [vmem:[%s262 + $0x38] sm:$0xff] %vm1169, %v1126
        %1178 = vst.msk [vmem:[%s262 + $0x40] sm:$0xff] %vm1169, %v1131
        %1179 = vst.msk [vmem:[%s262 + $0x48] sm:$0xff] %vm1169, %v1136
        %1180 = vst.msk [vmem:[%s262 + $0x50] sm:$0xff] %vm1169, %v1141
        %1181 = vst.msk [vmem:[%s262 + $0x58] sm:$0xff] %vm1169, %v1146
        %1182 = vst.msk [vmem:[%s262 + $0x60] sm:$0xff] %vm1169, %v1151
        %1183 = vst.msk [vmem:[%s262 + $0x68] sm:$0xff] %vm1169, %v1156
        %1184 = vst.msk [vmem:[%s262 + $0x70] sm:$0xff] %vm1169, %v1161
        %1185 = vst.msk [vmem:[%s262 + $0x78] sm:$0xff] %vm1169, %v1166
        %v1186 = vmul.f32 %v1091, %v1091
        %v1187 = vmul.f32 %v1096, %v1096
        %v1188 = vmul.f32 %v1101, %v1101
        %v1189 = vmul.f32 %v1106, %v1106
        %v1190 = vmul.f32 %v1111, %v1111
        %v1191 = vmul.f32 %v1116, %v1116
        %v1192 = vmul.f32 %v1121, %v1121
        %v1193 = vmul.f32 %v1126, %v1126
        %v1194 = vmul.f32 %v1131, %v1131
        %v1195 = vmul.f32 %v1136, %v1136
        %v1196 = vmul.f32 %v1141, %v1141
        %v1197 = vmul.f32 %v1146, %v1146
        %v1198 = vmul.f32 %v1151, %v1151
        %v1199 = vmul.f32 %v1156, %v1156
        %v1200 = vmul.f32 %v1161, %v1161
        %v1201 = vmul.f32 %v1166, %v1166
        %v1203 = vsel %vm1169, 1.0, 0
        %v1206 = vsel %vm1169, %v1186, 0
        %v1209 = vsel %vm1169, %v1187, 0
        %v1212 = vsel %vm1169, %v1188, 0
        %v1215 = vsel %vm1169, %v1189, 0
        %v1218 = vsel %vm1169, %v1190, 0
        %v1221 = vsel %vm1169, %v1191, 0
        %v1224 = vsel %vm1169, %v1192, 0
        %v1227 = vsel %vm1169, %v1193, 0
        %v1230 = vsel %vm1169, %v1194, 0
        %v1233 = vsel %vm1169, %v1195, 0
        %v1236 = vsel %vm1169, %v1196, 0
        %v1239 = vsel %vm1169, %v1197, 0
        %v1242 = vsel %vm1169, %v1198, 0
        %v1245 = vsel %vm1169, %v1199, 0
        %v1248 = vsel %vm1169, %v1200, 0
        %v1251 = vsel %vm1169, %v1201, 0
        %1253 = vmatprep.subr.mxu0 0.0
        %1254 = vmatpush1.xpose.msra.mxu0 %v1206
        %1255 = vmatprep.subr.mxu0 0.0
        %1256 = vmatpush1.xpose.msra.mxu0 %v1209
        %1257 = vmatprep.subr.mxu0 0.0
        %1258 = vmatpush1.xpose.msra.mxu0 %v1212
        %1259 = vmatprep.subr.mxu0 0.0
        %1260 = vmatpush1.xpose.msra.mxu0 %v1215
        %1261 = vmatprep.subr.mxu0 0.0
        %1262 = vmatpush1.xpose.msra.mxu0 %v1218
        %1263 = vmatprep.subr.mxu0 0.0
        %1264 = vmatpush1.xpose.msra.mxu0 %v1221
        %1265 = vmatprep.subr.mxu0 0.0
        %1266 = vmatpush1.xpose.msra.mxu0 %v1224
        %1267 = vmatprep.subr.mxu0 0.0
        %1268 = vmatpush1.xpose.msra.mxu0 %v1227
        %1269 = vmatprep.subr.mxu0 0.0
        %1270 = vmatpush1.xpose.msra.mxu0 %v1230
        %1271 = vmatprep.subr.mxu0 0.0
        %1272 = vmatpush1.xpose.msra.mxu0 %v1233
        %1273 = vmatprep.subr.mxu0 0.0
        %1274 = vmatpush1.xpose.msra.mxu0 %v1236
        %1275 = vmatprep.subr.mxu0 0.0
        %1276 = vmatpush1.xpose.msra.mxu0 %v1239
        %1277 = vmatprep.subr.mxu0 0.0
        %1278 = vmatpush1.xpose.msra.mxu0 %v1242
        %1279 = vmatprep.subr.mxu0 0.0
        %1280 = vmatpush1.xpose.msra.mxu0 %v1245
        %1281 = vmatprep.subr.mxu0 0.0
        %1282 = vmatpush1.xpose.msra.mxu0 %v1248
        %1283 = vmatprep.subr.mxu0 0.0
        %1284 = vmatpush1.xpose.msra.mxu0 %v1251
        %1285 = vmatprep.subr.mxu0 0.0
        %1286 = vmatpush1.xpose.msra.mxu0 0.0
        %1287 = vmatprep.subr.mxu0 0.0
        %1288 = vmatpush1.xpose.msra.mxu0 0.0
        %1289 = vmatprep.subr.mxu0 0.0
        %1290 = vmatpush1.xpose.msra.mxu0 0.0
        %1291 = vmatprep.subr.mxu0 0.0
        %1292 = vmatpush1.xpose.msra.mxu0 0.0
        %1293 = vmatprep.subr.mxu0 0.0
        %1294 = vmatpush1.xpose.msra.mxu0 0.0
        %1295 = vmatprep.subr.mxu0 0.0
        %1296 = vmatpush1.xpose.msra.mxu0 0.0
        %1297 = vmatprep.subr.mxu0 0.0
        %1298 = vmatpush1.xpose.msra.mxu0 0.0
        %1299 = vmatprep.subr.mxu0 0.0
        %1300 = vmatpush1.xpose.msra.mxu0 0.0
        %1301 = vmatprep.subr.mxu0 0.0
        %1302 = vmatpush1.xpose.msra.mxu0 0.0
        %1303 = vmatprep.subr.mxu0 0.0
        %1304 = vmatpush1.xpose.msra.mxu0 0.0
        %1305 = vmatprep.subr.mxu0 0.0
        %1306 = vmatpush1.xpose.msra.mxu0 0.0
        %1307 = vmatprep.subr.mxu0 0.0
        %1308 = vmatpush1.xpose.msra.mxu0 0.0
        %1309 = vmatprep.subr.mxu0 0.0
        %1310 = vmatpush1.xpose.msra.mxu0 0.0
        %1311 = vmatprep.subr.mxu0 0.0
        %1312 = vmatpush1.xpose.msra.mxu0 0.0
        %1313 = vmatprep.subr.mxu0 0.0
        %1314 = vmatpush1.xpose.msra.mxu0 0.0
        %1315 = vmatprep.subr.mxu0 0.0
        %1316 = vmatpush1.xpose.msra.mxu0 0.0
        %1317 = vmatprep.mubr.f32.mxu0 0.0
        %1318 = vmatmul.mubr.f32.gmra.mrb[0].mxu0 %v1203
        %v1319 = vpop.f32.mrb[0].mxu0
        %v1320 = vadd.f32 0.0, %v1319
        %v1321 = vpop.f32.mrb[0].mxu0
        %1322 = vdwg.mxu0
        %1323 = vst [vmem:[%s252] sm:$0xff] %v1320
        %p1324 = scmp.lt.s32.totalorder %s21, 1
        %s1325 = scalar_select %p1324, %s21, 1
        %s1326 = smul.addr %s1325, 16
        %s1327 = smul.addr %s1326, 8
        %s1328 = scalar_lea.vmem %s5, %s1327
        %s1329 = sand.u32 %s165, 1
        %s1330 = scalar_lea.sflag [#allocation3], %s1329
        %s1331 = sand.u32 %s165, 1
        %s1332 = smul.addr %s1331, 8
        %s1333 = scalar_lea.vmem [#allocation2], %s1332
        // Predicated region
        $region41: #{tpu_custom_call.1} parent=39 // pred_check
          %p1334 = pneg %p149
        $region42: #{tpu_custom_call.1} parent=39 // pred_check_branch
          %1336 = sbr.rel (%p1334) target = $region44
        $region43: #{tpu_custom_call.1} parent=39 // pred_region
          _
        $region44: #{tpu_custom_call.1} parent=39 // pred_fallthru
          _
        // Predicated region
        $region45: #{tpu_custom_call.1} parent=39 // pred_check
          %p1337 = pneg %p175
        $region46: #{tpu_custom_call.1} parent=39 // pred_check_branch
          %1339 = sbr.rel (%p1337) target = $region48
        $region47: #{tpu_custom_call.1} parent=39 // pred_region
          %s1341 = ssub.s32 128, 128
          %1342 = vsyncadd %s1330, %s1341
          %s1343 = smul.addr %s21, 128
          %s1344 = scalar_lea.hbm %s6, %s1343
          %s1346 = sshll.u32 %s1333, 4
          %s1347 = int_to_ptr.vmem [resolvable:$true] %s1346
          %1349 = dma.vmem_to_hbm [thread:$0]  %s1347, 128, %s1344, %s1330
        $region48: #{tpu_custom_call.1} parent=39 // pred_fallthru
          _
      $region40: #{tpu_custom_call.1} parent=5 // pred_fallthru
        _
      %p1350 = scmp.le.s32.totalorder 2, %s16
      // Predicated region
      $region49: #{tpu_custom_call.1} parent=5 // pred_check
        %p1351 = pneg %p1350
      $region50: #{tpu_custom_call.1} parent=5 // pred_check_branch
        %1353 = sbr.rel (%p1351) target = $region52
      $region51: #{tpu_custom_call.1} parent=5 // pred_region
        %s1354 = ssub.s32 %s16, 2
        // Predicated region
        $region53: #{tpu_custom_call.1} parent=51 // pred_check
          %p1355 = pneg %p155
        $region54: #{tpu_custom_call.1} parent=51 // pred_check_branch
          %1357 = sbr.rel (%p1355) target = $region56
        $region55: #{tpu_custom_call.1} parent=51 // pred_region
          %p1358 = scmp.lt.s32.totalorder %s22, 1
          %s1359 = scalar_select %p1358, %s22, 1
          %s1360 = smul.addr %s1359, 16
          %s1361 = smul.addr %s1360, 8
          %s1362 = scalar_lea.vmem %s5, %s1361
        $region56: #{tpu_custom_call.1} parent=51 // pred_fallthru
          _
        // Predicated region
        $region57: #{tpu_custom_call.1} parent=51 // pred_check
          %p1363 = pneg %p181
        $region58: #{tpu_custom_call.1} parent=51 // pred_check_branch
          %1365 = sbr.rel (%p1363) target = $region60
        $region59: #{tpu_custom_call.1} parent=51 // pred_region
          %s1366 = sand.u32 %s166, 1
          %s1367 = scalar_lea.sflag [#allocation3], %s1366
          %s1368 = sand.u32 %s166, 1
          %s1369 = smul.addr %s1368, 8
          %s1370 = scalar_lea.vmem [#allocation2], %s1369
          %1371 = dma.done %s1367, 128
        $region60: #{tpu_custom_call.1} parent=51 // pred_fallthru
          _
      $region52: #{tpu_custom_call.1} parent=5 // pred_fallthru
        _
    $region6: #{tpu_custom_call.1} parent=1 // loop_footer
      %s20 = sadd.s32 1, %s16
    $region7: #{tpu_custom_call.1} parent=1 // loop_footer_branch
      %15 = sbr.rel target = $region3
    $region8: #{tpu_custom_call.1} parent=1 // loop_exit
      _
    %1372 = vsyncpa [#allocation3], 1
    %s1373 = scalar_lea.sflag [#allocation3], 1
    %1374 = vsyncpa %s1373, 1

</llo_original>
